<compile_context>
chip_gen: v5e
topology: v5e:2x2
jax: 0.10.0
libtpu: 0.0.40
codegen_flags: <defaults>
</compile_context>

<pallas_src>
ALIGN_CORNERS = False

import functools

import jax
import jax.numpy as jnp
from jax import lax
from jax.experimental import pallas as pl
from jax.experimental.pallas import tpu as pltpu


# ---------------------------------------------------------------------------
# Per-generation VMEM budgets (review items 2/3)
# ---------------------------------------------------------------------------
def _physical_vmem_bytes():
    try:
        info = pltpu.get_tpu_info()
        for attr in ("vmem_capacity_bytes", "vmem_bytes", "vmem_size_bytes"):
            v = getattr(info, attr, None)
            if v:
                return int(v)
    except Exception:       # API drift / not queryable: assume smallest (v7x)
        pass
    return 64 * 1024 * 1024


_PHYS_VMEM = _physical_vmem_bytes()
# Scoped limit: leave headroom for compiler scratch + pipeline bookkeeping.
#   v7x (64 MiB physical) -> 48 MiB;  v5e/v6e (128 MiB) -> 96 MiB.
_VMEM_LIMIT = min(int(_PHYS_VMEM * 0.75), _PHYS_VMEM - 8 * 1024 * 1024)
# Budget the tile-size heuristics plan against.
_TILE_BUDGET = int(_VMEM_LIMIT * 0.85)


def _div_tile(total, cap):
    """Largest multiple of 128 dividing `total` that is <= cap (>=128);
    `total` itself when it is not a multiple of 128 (full-extent block)."""
    if total % 128 != 0:
        return total
    t = min(total, max(128, (int(cap) // 128) * 128))
    while total % t:
        t -= 128
    return t


def _pick_gather_tiles(C, HW, itemsize, budget):
    """Channel tile TC (the (TC, HW) source block is double-buffered and
    resident across HW chunks) and lane-dense output tile THW."""
    tc = C
    if C % 8 == 0:
        while tc > 8 and 2 * tc * HW * itemsize > budget // 2:
            tc -= 8
        while C % tc:
            tc -= 8
    # TODO(synk): if even TC=8 cannot fit (extremely large H*W), the source
    # block should move to pl.ANY HBM with a manual paged gather; not done.
    rem = max(budget - 2 * tc * HW * itemsize, 1 << 20)
    # per output column: f32 accumulator + gathered corner + int32 indices
    # + double-buffered out tile + row temporaries.
    per_col = tc * (20 + 3 * itemsize) + 128
    thw = _div_tile(HW, rem // per_col)
    return tc, thw


def _pick_onehot_tiles(C, HW, itemsize, budget):
    if HW % 128 != 0:
        return HW, HW                      # tiny/irregular: single block
    thw = _div_tile(HW, 2048)
    # S^T slab + its ~3 select temporaries (f32) stay under ~40% of budget.
    tq = _div_tile(HW, max(128, int(budget * 0.4) // (16 * thw)))
    return tq, thw


# ---------------------------------------------------------------------------
# Shared bilinear-sampling math (identical op order in kernels and reference)
# ---------------------------------------------------------------------------
def _bilinear_terms(vx, vy, H, W):
    """Elementwise terms from absolute sample coords (vx, vy) = grid + flow:
    corner indices, validity-folded corner weights, and the in-bounds mask."""
    gx = 2.0 * vx / max(W - 1, 1) - 1.0
    gy = 2.0 * vy / max(H - 1, 1) - 1.0
    if ALIGN_CORNERS:
        ix = (gx + 1.0) * 0.5 * (W - 1)
        iy = (gy + 1.0) * 0.5 * (H - 1)
    else:
        ix = ((gx + 1.0) * W - 1.0) * 0.5
        iy = ((gy + 1.0) * H - 1.0) * 0.5

    ix0f = jnp.floor(ix)
    iy0f = jnp.floor(iy)
    wx1 = ix - ix0f
    wx0 = 1.0 - wx1
    wy1 = iy - iy0f
    wy0 = 1.0 - wy1

    ix0 = ix0f.astype(jnp.int32)
    iy0 = iy0f.astype(jnp.int32)
    ix1 = ix0 + 1
    iy1 = iy0 + 1

    def vw(xc, yc, w):
        # padding_mode='zeros': out-of-bounds corners contribute nothing.
        valid = (xc >= 0) & (xc < W) & (yc >= 0) & (yc < H)
        return jnp.where(valid, w, 0.0)

    w00 = vw(ix0, iy0, wx0 * wy0)
    w01 = vw(ix1, iy0, wx1 * wy0)
    w10 = vw(ix0, iy1, wx0 * wy1)
    w11 = vw(ix1, iy1, wx1 * wy1)

    mask = (jnp.abs(gx) < 1.0) & (jnp.abs(gy) < 1.0)
    return (ix0, ix1, iy0, iy1), (w00, w01, w10, w11), mask


# ---------------------------------------------------------------------------
# Primary kernel: direct 4-corner gather, tiled over channels and HW chunks
# ---------------------------------------------------------------------------
def _warp_gather_kernel(x_ref, vg_ref, out_ref, mask_ref, *, H, W):
    # x_ref:    (TC, HW)   full source spatial extent for this channel tile
    # vg_ref:   (2, THW)   vgrid = grid + flow for this output HW tile
    # out_ref:  (TC, THW)
    # mask_ref: (1, THW) f32
    TC = x_ref.shape[0]
    THW = out_ref.shape[-1]

    vg = vg_ref[...].astype(jnp.float32)
    (ix0, ix1, iy0, iy1), (w00, w01, w10, w11), mask = _bilinear_terms(
        vg[0:1, :], vg[1:2, :], H, W)
    maskf = mask.astype(jnp.float32)                      # (1, THW)

    x = x_ref[...]                                        # native dtype

    def add_corner(acc, xc, yc, w):
        # Weight is already zero for out-of-bounds corners; clamp so the
        # gather index is always legal.
        idx = jnp.clip(yc, 0, H - 1) * W + jnp.clip(xc, 0, W - 1)   # (1, THW)
        idxb = jnp.broadcast_to(idx, (TC, THW))
        g = jnp.take_along_axis(x, idxb, axis=1, mode="promise_in_bounds")
        return acc + g.astype(jnp.float32) * w

    # In-place accumulation: one live (TC, THW) f32 temp, not four.
    acc = jnp.zeros((TC, THW), jnp.float32)
    acc = add_corner(acc, ix0, iy0, w00)
    acc = add_corner(acc, ix1, iy0, w01)
    acc = add_corner(acc, ix0, iy1, w10)
    acc = add_corner(acc, ix1, iy1, w11)

    out_ref[...] = (acc * maskf).astype(out_ref.dtype)
    mask_ref[...] = maskf


# ---------------------------------------------------------------------------
# Fallback kernel: tiled one-hot S^T slab + MXU matmul (safety net only)
# ---------------------------------------------------------------------------
def _warp_onehot_kernel(x_ref, vg_ref, out_ref, mask_ref, acc_ref, trm_ref,
                        *, H, W):
    # x_ref:  (C, TQ)    source-pixel chunk k
    # vg_ref: (2, THW)   vgrid for this output HW tile
    # acc_ref:(C, THW) f32, trm_ref:(8, THW) f32 hoisted bilinear terms
    k = pl.program_id(2)
    nk = pl.num_programs(2)
    TQ = x_ref.shape[-1]
    THW = out_ref.shape[-1]

    # Hoisted bilinear terms: computed once per (batch, HW tile), reused for
    # every source chunk k (review item 4).
    @pl.when(k == 0)
    def _():
        vg = vg_ref[...].astype(jnp.float32)
        (ix0, _ix1, iy0, _iy1), (w00, w01, w10, w11), mask = _bilinear_terms(
            vg[0:1, :], vg[1:2, :], H, W)
        trm_ref[0:1, :] = w00
        trm_ref[1:2, :] = w01
        trm_ref[2:3, :] = w10
        trm_ref[3:4, :] = w11
        trm_ref[4:5, :] = (iy0 * W + ix0).astype(jnp.float32)   # top-left idx
        trm_ref[5:6, :] = mask.astype(jnp.float32)
        acc_ref[...] = jnp.zeros_like(acc_ref)

    # S^T slab for source pixels q in [k*TQ, (k+1)*TQ).  The four bilinear
    # corners sit at fixed offsets {0, 1, W, W+1} from the (possibly
    # out-of-range, zero-weighted) top-left index.  All values are small
    # integers, exact in f32, so a single delta map + 4 constant compares
    # builds the slab.
    idx00 = trm_ref[4:5, :]                                     # (1, THW)
    q = ((k * TQ).astype(jnp.float32)
         + lax.broadcasted_iota(jnp.int32, (TQ, THW), 0).astype(jnp.float32))
    delta = q - idx00                                           # (TQ, THW)
    s_t = (jnp.where(delta == 0.0, trm_ref[0:1, :], 0.0)
           + jnp.where(delta == 1.0, trm_ref[1:2, :], 0.0)
           + jnp.where(delta == float(W), trm_ref[2:3, :], 0.0)
           + jnp.where(delta == float(W + 1), trm_ref[3:4, :], 0.0))

    acc_ref[...] += jnp.dot(x_ref[...].astype(jnp.float32), s_t,
                            preferred_element_type=jnp.float32)

    @pl.when(k == nk - 1)
    def _():
        maskf = trm_ref[5:6, :]
        out_ref[...] = (acc_ref[...] * maskf).astype(out_ref.dtype)
        mask_ref[...] = maskf


# ---------------------------------------------------------------------------
# pallas_call builders
# ---------------------------------------------------------------------------
def _make_gather_call(B, C, H, W, dtype):
    HW = H * W
    itemsize = jnp.dtype(dtype).itemsize
    TC, THW = _pick_gather_tiles(C, HW, itemsize, _TILE_BUDGET)
    n_c = C // TC
    n_hw = HW // THW
    if n_c == 1:
        dim_sem = ("parallel", "parallel", "parallel")
    else:
        # mask output block is revisited across the channel axis, and parallel
        # dims must lead the grid -> channel & HW axes become "arbitrary".
        dim_sem = ("parallel", "arbitrary", "arbitrary")
    kernel = functools.partial(_warp_gather_kernel, H=H, W=W)
    return pl.pallas_call(
        kernel,
        out_shape=(jax.ShapeDtypeStruct((B, C, HW), dtype),
                   jax.ShapeDtypeStruct((B, 1, HW), jnp.float32)),
        grid=(B, n_c, n_hw),
        in_specs=[
            pl.BlockSpec((None, TC, HW), lambda b, c, s: (b, c, 0)),
            pl.BlockSpec((None, 2, THW), lambda b, c, s: (b, 0, s)),
        ],
        out_specs=(
            pl.BlockSpec((None, TC, THW), lambda b, c, s: (b, c, s)),
            pl.BlockSpec((None, 1, THW), lambda b, c, s: (b, 0, s)),
        ),
        compiler_params=pltpu.CompilerParams(
            dimension_semantics=dim_sem, vmem_limit_bytes=_VMEM_LIMIT),
    )


def _make_onehot_call(B, C, H, W, dtype):
    HW = H * W
    itemsize = jnp.dtype(dtype).itemsize
    TQ, THW = _pick_onehot_tiles(C, HW, itemsize, _TILE_BUDGET)
    n_hw = HW // THW
    n_k = HW // TQ
    kernel = functools.partial(_warp_onehot_kernel, H=H, W=W)
    return pl.pallas_call(
        kernel,
        out_shape=(jax.ShapeDtypeStruct((B, C, HW), dtype),
                   jax.ShapeDtypeStruct((B, 1, HW), jnp.float32)),
        grid=(B, n_hw, n_k),
        in_specs=[
            pl.BlockSpec((None, C, TQ), lambda b, s, k: (b, 0, k)),
            pl.BlockSpec((None, 2, THW), lambda b, s, k: (b, 0, s)),
        ],
        out_specs=(
            pl.BlockSpec((None, C, THW), lambda b, s, k: (b, 0, s)),
            pl.BlockSpec((None, 1, THW), lambda b, s, k: (b, 0, s)),
        ),
        scratch_shapes=[pltpu.VMEM((C, THW), jnp.float32),
                        pltpu.VMEM((8, THW), jnp.float32)],
        compiler_params=pltpu.CompilerParams(
            dimension_semantics=("parallel", "parallel", "arbitrary"),
            vmem_limit_bytes=_VMEM_LIMIT),
    )


# ---------------------------------------------------------------------------
# Wrapper: lane-dense layout + one-time (cached, logged) path selection
# ---------------------------------------------------------------------------
_IMPL_CACHE = {}


def _base_grid(H, W):
    """The module's registered `grid` buffer, flattened to (2, HW), f32."""
    HW = H * W
    xx = jnp.broadcast_to(jnp.arange(W, dtype=jnp.float32)[None, :], (H, W))
    yy = jnp.broadcast_to(jnp.arange(H, dtype=jnp.float32)[:, None], (H, W))
    return jnp.stack([xx.reshape(HW), yy.reshape(HW)], axis=0)


def _get_impl(B, C, H, W, dtype):
    key = (B, C, H, W, jnp.dtype(dtype).name)
    impl = _IMPL_CACHE.get(key)
    if impl is not None:
        return impl
    HW = H * W
    x_sds = jax.ShapeDtypeStruct((B, C, HW), dtype)
    v_sds = jax.ShapeDtypeStruct((B, 2, HW), jnp.float32)
    impl = jax.jit(_make_gather_call(B, C, H, W, dtype))
    try:
        # Lowering / AOT-compile check only (no runtime numeric probe):
        # Mosaic dynamic-gather coverage varies across jax/libtpu releases.
        impl.lower(x_sds, v_sds).compile()
    except Exception as err:  # noqa: BLE001 - any lowering/compile failure
        print("[warp_pallas] dynamic-gather kernel did not compile "
              f"({type(err).__name__}); using one-hot MXU fallback path")
        impl = jax.jit(_make_onehot_call(B, C, H, W, dtype))
    _IMPL_CACHE[key] = impl
    return impl


def warp_pallas(x, flo):
    """Pallas equivalent of WarpModule.forward -> (masked_output, mask)."""
    B, C, H, W = x.shape
    assert flo.shape == (B, 2, H, W)
    HW = H * W
    impl = _get_impl(B, C, H, W, x.dtype)
    # vgrid = grid + flow, computed by XLA (fuses with the iota that builds
    # the grid); removes the separate grid input and its DMA from the kernel.
    vgrid = _base_grid(H, W)[None] + flo.reshape(B, 2, HW).astype(jnp.float32)
    out2, mask2 = impl(x.reshape(B, C, HW), vgrid)
    out = out2.reshape(B, C, H, W)
    mask = mask2.reshape(B, H, W) > 0.5
    return out, mask


# ---------------------------------------------------------------------------
# Pure-JAX reference (F.grid_sample bilinear, zeros, align_corners=False)
# ---------------------------------------------------------------------------
def warp_reference(x, flo):
    B, C, H, W = x.shape
    xx = lax.broadcasted_iota(jnp.float32, (H, W), 1)
    yy = lax.broadcasted_iota(jnp.float32, (H, W), 0)
    vx = xx[None] + flo[:, 0].astype(jnp.float32)
    vy = yy[None] + flo[:, 1].astype(jnp.float32)
    (ix0, ix1, iy0, iy1), (w00, w01, w10, w11), mask = _bilinear_terms(
        vx, vy, H, W)

    xf = x.reshape(B, C, H * W)

    def corner(xc, yc, w):
        idx = (jnp.clip(yc, 0, H - 1) * W
               + jnp.clip(xc, 0, W - 1)).reshape(B, 1, H * W)
        g = jnp.take_along_axis(xf, jnp.broadcast_to(idx, (B, C, H * W)),
                                axis=2)
        return g.reshape(B, C, H, W).astype(jnp.float32) * w[:, None]

    out = (corner(ix0, iy0, w00) + corner(ix1, iy0, w01)
           + corner(ix0, iy1, w10) + corner(ix1, iy1, w11))
    out = out * mask[:, None].astype(jnp.float32)
    return out.astype(x.dtype), mask


if __name__ == "__main__":
    B, C, H, W = 2, 4, 16, 16
    key = jax.random.PRNGKey(0)
    kx, kf = jax.random.split(key)
    x = jax.random.normal(kx, (B, C, H, W), dtype=jnp.float32)
    # Flow magnitude of a few pixels so some samples land out of bounds.
    flo = 3.0 * jax.random.normal(kf, (B, 2, H, W), dtype=jnp.float32)

    out, mask = warp_pallas(x, flo)
    out = jax.block_until_ready(out)
    mask = jax.block_until_ready(mask)

    out_ref, mask_ref = warp_reference(x, flo)
    assert out.shape == (B, C, H, W) and mask.shape == (B, H, W)
    assert jnp.allclose(out, out_ref, atol=1e-4, rtol=1e-4), "output mismatch"
    assert bool(jnp.all(mask == mask_ref)), "mask mismatch"

    print("KERNEL_OK")
</pallas_src>

<mosaic_0001>
module attributes {stable_mosaic.version = 11 : i64} {
  func.func @_warp_onehot_kernel(%arg0: i32, %arg1: i32, %arg2: i32, %arg3: memref<1x4x256xf32, #tpu.memory_space<vmem>>, %arg4: memref<1x2x256xf32, #tpu.memory_space<vmem>>, %arg5: memref<1x4x256xf32, #tpu.memory_space<vmem>>, %arg6: memref<1x1x256xf32, #tpu.memory_space<vmem>>, %arg7: memref<4x256xf32, #tpu.memory_space<vmem>>, %arg8: memref<8x256xf32, #tpu.memory_space<vmem>>) attributes {dimension_semantics = [#tpu.dimension_semantics<parallel>, #tpu.dimension_semantics<parallel>, #tpu.dimension_semantics<arbitrary>], iteration_bounds = array<i64: 2, 1, 1>, scalar_prefetch = 0 : i64, scratch_operands = 2 : i64, tpu.core_type = #tpu.core_type<tc>, window_params = [{transform_indices = @transform_0, window_bounds = array<i64: 1, 4, 256>}, {transform_indices = @transform_1, window_bounds = array<i64: 1, 2, 256>}, {transform_indices = @transform_2, window_bounds = array<i64: 1, 4, 256>}, {transform_indices = @transform_3, window_bounds = array<i64: 1, 1, 256>}]} {
    %c0_i32 = arith.constant 0 : i32
    %0 = arith.cmpi eq, %arg2, %c0_i32 : i32
    %1 = arith.extui %0 : i1 to i32
    %c0_i32_0 = arith.constant 0 : i32
    %2 = arith.cmpi ne, %1, %c0_i32_0 : i32
    scf.if %2 {
      %c0_23 = arith.constant 0 : index
      %c0_24 = arith.constant 0 : index
      %c0_25 = arith.constant 0 : index
      %52 = vector.load %arg4[%c0_23, %c0_24, %c0_25] : memref<1x2x256xf32, #tpu.memory_space<vmem>>, vector<1x2x256xf32>
      %53 = vector.shape_cast %52 : vector<1x2x256xf32> to vector<2x256xf32>
      %54 = vector.extract_strided_slice %53 {offsets = [0, 0], sizes = [1, 256], strides = [1, 1]} : vector<2x256xf32> to vector<1x256xf32>
      %55 = vector.extract_strided_slice %53 {offsets = [1, 0], sizes = [1, 256], strides = [1, 1]} : vector<2x256xf32> to vector<1x256xf32>
      %cst_26 = arith.constant 2.000000e+00 : f32
      %56 = vector.broadcast %cst_26 : f32 to vector<1x256xf32>
      %57 = arith.mulf %56, %54 : vector<1x256xf32>
      %cst_27 = arith.constant 1.500000e+01 : f32
      %58 = vector.broadcast %cst_27 : f32 to vector<1x256xf32>
      %59 = arith.divf %57, %58 : vector<1x256xf32>
      %cst_28 = arith.constant 1.000000e+00 : f32
      %60 = vector.broadcast %cst_28 : f32 to vector<1x256xf32>
      %61 = arith.subf %59, %60 : vector<1x256xf32>
      %cst_29 = arith.constant 2.000000e+00 : f32
      %62 = vector.broadcast %cst_29 : f32 to vector<1x256xf32>
      %63 = arith.mulf %62, %55 : vector<1x256xf32>
      %cst_30 = arith.constant 1.500000e+01 : f32
      %64 = vector.broadcast %cst_30 : f32 to vector<1x256xf32>
      %65 = arith.divf %63, %64 : vector<1x256xf32>
      %cst_31 = arith.constant 1.000000e+00 : f32
      %66 = vector.broadcast %cst_31 : f32 to vector<1x256xf32>
      %67 = arith.subf %65, %66 : vector<1x256xf32>
      %cst_32 = arith.constant 1.000000e+00 : f32
      %68 = vector.broadcast %cst_32 : f32 to vector<1x256xf32>
      %69 = arith.addf %61, %68 : vector<1x256xf32>
      %cst_33 = arith.constant 1.600000e+01 : f32
      %70 = vector.broadcast %cst_33 : f32 to vector<1x256xf32>
      %71 = arith.mulf %69, %70 : vector<1x256xf32>
      %cst_34 = arith.constant 1.000000e+00 : f32
      %72 = vector.broadcast %cst_34 : f32 to vector<1x256xf32>
      %73 = arith.subf %71, %72 : vector<1x256xf32>
      %cst_35 = arith.constant 5.000000e-01 : f32
      %74 = vector.broadcast %cst_35 : f32 to vector<1x256xf32>
      %75 = arith.mulf %73, %74 : vector<1x256xf32>
      %cst_36 = arith.constant 1.000000e+00 : f32
      %76 = vector.broadcast %cst_36 : f32 to vector<1x256xf32>
      %77 = arith.addf %67, %76 : vector<1x256xf32>
      %cst_37 = arith.constant 1.600000e+01 : f32
      %78 = vector.broadcast %cst_37 : f32 to vector<1x256xf32>
      %79 = arith.mulf %77, %78 : vector<1x256xf32>
      %cst_38 = arith.constant 1.000000e+00 : f32
      %80 = vector.broadcast %cst_38 : f32 to vector<1x256xf32>
      %81 = arith.subf %79, %80 : vector<1x256xf32>
      %cst_39 = arith.constant 5.000000e-01 : f32
      %82 = vector.broadcast %cst_39 : f32 to vector<1x256xf32>
      %83 = arith.mulf %81, %82 : vector<1x256xf32>
      %84 = math.floor %75 : vector<1x256xf32>
      %85 = math.floor %83 : vector<1x256xf32>
      %86 = arith.subf %75, %84 : vector<1x256xf32>
      %cst_40 = arith.constant 1.000000e+00 : f32
      %87 = vector.broadcast %cst_40 : f32 to vector<1x256xf32>
      %88 = arith.subf %87, %86 : vector<1x256xf32>
      %89 = arith.subf %83, %85 : vector<1x256xf32>
      %cst_41 = arith.constant 1.000000e+00 : f32
      %90 = vector.broadcast %cst_41 : f32 to vector<1x256xf32>
      %91 = arith.subf %90, %89 : vector<1x256xf32>
      %92 = arith.fptosi %84 : vector<1x256xf32> to vector<1x256xi32>
      %93 = arith.fptosi %85 : vector<1x256xf32> to vector<1x256xi32>
      %c1_i32 = arith.constant 1 : i32
      %94 = vector.broadcast %c1_i32 : i32 to vector<1x256xi32>
      %95 = arith.addi %92, %94 : vector<1x256xi32>
      %c1_i32_42 = arith.constant 1 : i32
      %96 = vector.broadcast %c1_i32_42 : i32 to vector<1x256xi32>
      %97 = arith.addi %93, %96 : vector<1x256xi32>
      %98 = arith.mulf %88, %91 : vector<1x256xf32>
      %c0_i32_43 = arith.constant 0 : i32
      %99 = vector.broadcast %c0_i32_43 : i32 to vector<1x256xi32>
      %100 = arith.cmpi sge, %92, %99 : vector<1x256xi32>
      %c16_i32 = arith.constant 16 : i32
      %101 = vector.broadcast %c16_i32 : i32 to vector<1x256xi32>
      %102 = arith.cmpi slt, %92, %101 : vector<1x256xi32>
      %103 = arith.andi %100, %102 : vector<1x256xi1>
      %c0_i32_44 = arith.constant 0 : i32
      %104 = vector.broadcast %c0_i32_44 : i32 to vector<1x256xi32>
      %105 = arith.cmpi sge, %93, %104 : vector<1x256xi32>
      %106 = arith.andi %103, %105 : vector<1x256xi1>
      %c16_i32_45 = arith.constant 16 : i32
      %107 = vector.broadcast %c16_i32_45 : i32 to vector<1x256xi32>
      %108 = arith.cmpi slt, %93, %107 : vector<1x256xi32>
      %109 = arith.andi %106, %108 : vector<1x256xi1>
      %cst_46 = arith.constant 0.000000e+00 : f32
      %110 = vector.broadcast %cst_46 : f32 to vector<1x256xf32>
      %111 = arith.select %109, %98, %110 : vector<1x256xi1>, vector<1x256xf32>
      %112 = arith.mulf %86, %91 : vector<1x256xf32>
      %c0_i32_47 = arith.constant 0 : i32
      %113 = vector.broadcast %c0_i32_47 : i32 to vector<1x256xi32>
      %114 = arith.cmpi sge, %95, %113 : vector<1x256xi32>
      %c16_i32_48 = arith.constant 16 : i32
      %115 = vector.broadcast %c16_i32_48 : i32 to vector<1x256xi32>
      %116 = arith.cmpi slt, %95, %115 : vector<1x256xi32>
      %117 = arith.andi %114, %116 : vector<1x256xi1>
      %c0_i32_49 = arith.constant 0 : i32
      %118 = vector.broadcast %c0_i32_49 : i32 to vector<1x256xi32>
      %119 = arith.cmpi sge, %93, %118 : vector<1x256xi32>
      %120 = arith.andi %117, %119 : vector<1x256xi1>
      %c16_i32_50 = arith.constant 16 : i32
      %121 = vector.broadcast %c16_i32_50 : i32 to vector<1x256xi32>
      %122 = arith.cmpi slt, %93, %121 : vector<1x256xi32>
      %123 = arith.andi %120, %122 : vector<1x256xi1>
      %cst_51 = arith.constant 0.000000e+00 : f32
      %124 = vector.broadcast %cst_51 : f32 to vector<1x256xf32>
      %125 = arith.select %123, %112, %124 : vector<1x256xi1>, vector<1x256xf32>
      %126 = arith.mulf %88, %89 : vector<1x256xf32>
      %c0_i32_52 = arith.constant 0 : i32
      %127 = vector.broadcast %c0_i32_52 : i32 to vector<1x256xi32>
      %128 = arith.cmpi sge, %92, %127 : vector<1x256xi32>
      %c16_i32_53 = arith.constant 16 : i32
      %129 = vector.broadcast %c16_i32_53 : i32 to vector<1x256xi32>
      %130 = arith.cmpi slt, %92, %129 : vector<1x256xi32>
      %131 = arith.andi %128, %130 : vector<1x256xi1>
      %c0_i32_54 = arith.constant 0 : i32
      %132 = vector.broadcast %c0_i32_54 : i32 to vector<1x256xi32>
      %133 = arith.cmpi sge, %97, %132 : vector<1x256xi32>
      %134 = arith.andi %131, %133 : vector<1x256xi1>
      %c16_i32_55 = arith.constant 16 : i32
      %135 = vector.broadcast %c16_i32_55 : i32 to vector<1x256xi32>
      %136 = arith.cmpi slt, %97, %135 : vector<1x256xi32>
      %137 = arith.andi %134, %136 : vector<1x256xi1>
      %cst_56 = arith.constant 0.000000e+00 : f32
      %138 = vector.broadcast %cst_56 : f32 to vector<1x256xf32>
      %139 = arith.select %137, %126, %138 : vector<1x256xi1>, vector<1x256xf32>
      %140 = arith.mulf %86, %89 : vector<1x256xf32>
      %c0_i32_57 = arith.constant 0 : i32
      %141 = vector.broadcast %c0_i32_57 : i32 to vector<1x256xi32>
      %142 = arith.cmpi sge, %95, %141 : vector<1x256xi32>
      %c16_i32_58 = arith.constant 16 : i32
      %143 = vector.broadcast %c16_i32_58 : i32 to vector<1x256xi32>
      %144 = arith.cmpi slt, %95, %143 : vector<1x256xi32>
      %145 = arith.andi %142, %144 : vector<1x256xi1>
      %c0_i32_59 = arith.constant 0 : i32
      %146 = vector.broadcast %c0_i32_59 : i32 to vector<1x256xi32>
      %147 = arith.cmpi sge, %97, %146 : vector<1x256xi32>
      %148 = arith.andi %145, %147 : vector<1x256xi1>
      %c16_i32_60 = arith.constant 16 : i32
      %149 = vector.broadcast %c16_i32_60 : i32 to vector<1x256xi32>
      %150 = arith.cmpi slt, %97, %149 : vector<1x256xi32>
      %151 = arith.andi %148, %150 : vector<1x256xi1>
      %cst_61 = arith.constant 0.000000e+00 : f32
      %152 = vector.broadcast %cst_61 : f32 to vector<1x256xf32>
      %153 = arith.select %151, %140, %152 : vector<1x256xi1>, vector<1x256xf32>
      %154 = math.absf %61 : vector<1x256xf32>
      %cst_62 = arith.constant 1.000000e+00 : f32
      %155 = vector.broadcast %cst_62 : f32 to vector<1x256xf32>
      %156 = arith.cmpf olt, %154, %155 : vector<1x256xf32>
      %157 = math.absf %67 : vector<1x256xf32>
      %cst_63 = arith.constant 1.000000e+00 : f32
      %158 = vector.broadcast %cst_63 : f32 to vector<1x256xf32>
      %159 = arith.cmpf olt, %157, %158 : vector<1x256xf32>
      %160 = arith.andi %156, %159 : vector<1x256xi1>
      %c0_64 = arith.constant 0 : index
      %c0_65 = arith.constant 0 : index
      %161 = vector.load %arg8[%c0_64, %c0_65] : memref<8x256xf32, #tpu.memory_space<vmem>>, vector<1x256xf32>
      tpu.vector_store %arg8[%c0_64, %c0_65], %111 {strides = array<i32>} : memref<8x256xf32, #tpu.memory_space<vmem>>, vector<1x256xf32>,
      %c1_66 = arith.constant 1 : index
      %c0_67 = arith.constant 0 : index
      %162 = vector.load %arg8[%c1_66, %c0_67] : memref<8x256xf32, #tpu.memory_space<vmem>>, vector<1x256xf32>
      tpu.vector_store %arg8[%c1_66, %c0_67], %125 {strides = array<i32>} : memref<8x256xf32, #tpu.memory_space<vmem>>, vector<1x256xf32>,
      %c2_68 = arith.constant 2 : index
      %c0_69 = arith.constant 0 : index
      %163 = vector.load %arg8[%c2_68, %c0_69] : memref<8x256xf32, #tpu.memory_space<vmem>>, vector<1x256xf32>
      tpu.vector_store %arg8[%c2_68, %c0_69], %139 {strides = array<i32>} : memref<8x256xf32, #tpu.memory_space<vmem>>, vector<1x256xf32>,
      %c3_70 = arith.constant 3 : index
      %c0_71 = arith.constant 0 : index
      %164 = vector.load %arg8[%c3_70, %c0_71] : memref<8x256xf32, #tpu.memory_space<vmem>>, vector<1x256xf32>
      tpu.vector_store %arg8[%c3_70, %c0_71], %153 {strides = array<i32>} : memref<8x256xf32, #tpu.memory_space<vmem>>, vector<1x256xf32>,
      %c16_i32_72 = arith.constant 16 : i32
      %165 = vector.broadcast %c16_i32_72 : i32 to vector<1x256xi32>
      %166 = arith.muli %93, %165 : vector<1x256xi32>
      %167 = arith.addi %166, %92 : vector<1x256xi32>
      %168 = arith.sitofp %167 : vector<1x256xi32> to vector<1x256xf32>
      %c4_73 = arith.constant 4 : index
      %c0_74 = arith.constant 0 : index
      %169 = vector.load %arg8[%c4_73, %c0_74] : memref<8x256xf32, #tpu.memory_space<vmem>>, vector<1x256xf32>
      tpu.vector_store %arg8[%c4_73, %c0_74], %168 {strides = array<i32>} : memref<8x256xf32, #tpu.memory_space<vmem>>, vector<1x256xf32>,
      %170 = arith.extui %160 : vector<1x256xi1> to vector<1x256xi32>
      %171 = arith.sitofp %170 : vector<1x256xi32> to vector<1x256xf32>
      %c5 = arith.constant 5 : index
      %c0_75 = arith.constant 0 : index
      %172 = vector.load %arg8[%c5, %c0_75] : memref<8x256xf32, #tpu.memory_space<vmem>>, vector<1x256xf32>
      tpu.vector_store %arg8[%c5, %c0_75], %171 {strides = array<i32>} : memref<8x256xf32, #tpu.memory_space<vmem>>, vector<1x256xf32>,
      %cst_76 = arith.constant 0.000000e+00 : f32
      %173 = vector.broadcast %cst_76 : f32 to vector<4x256xf32>
      %c0_77 = arith.constant 0 : index
      %c0_78 = arith.constant 0 : index
      %174 = vector.load %arg7[%c0_77, %c0_78] : memref<4x256xf32, #tpu.memory_space<vmem>>, vector<4x256xf32>
      tpu.vector_store %arg7[%c0_77, %c0_78], %173 {strides = array<i32>} : memref<4x256xf32, #tpu.memory_space<vmem>>, vector<4x256xf32>,
    } else {
    }
    %c4 = arith.constant 4 : index
    %c0 = arith.constant 0 : index
    %3 = vector.load %arg8[%c4, %c0] : memref<8x256xf32, #tpu.memory_space<vmem>>, vector<1x256xf32>
    %c256_i32 = arith.constant 256 : i32
    %4 = arith.muli %arg2, %c256_i32 : i32
    %5 = arith.sitofp %4 : i32 to f32
    %6 = tpu.iota {dimensions = array<i32: 0>} : vector<256x256xi32>
    %7 = arith.sitofp %6 : vector<256x256xi32> to vector<256x256xf32>
    %8 = vector.broadcast %5 : f32 to vector<256x256xf32>
    %9 = arith.addf %8, %7 : vector<256x256xf32>
    %10 = vector.broadcast %3 : vector<1x256xf32> to vector<256x256xf32>
    %11 = arith.subf %9, %10 : vector<256x256xf32>
    %cst = arith.constant 0.000000e+00 : f32
    %12 = vector.broadcast %cst : f32 to vector<256x256xf32>
    %13 = arith.cmpf oeq, %11, %12 : vector<256x256xf32>
    %c0_1 = arith.constant 0 : index
    %c0_2 = arith.constant 0 : index
    %14 = vector.load %arg8[%c0_1, %c0_2] : memref<8x256xf32, #tpu.memory_space<vmem>>, vector<1x256xf32>
    %cst_3 = arith.constant 0.000000e+00 : f32
    %15 = vector.shape_cast %14 : vector<1x256xf32> to vector<1x256xf32>
    %16 = vector.broadcast %15 : vector<1x256xf32> to vector<256x256xf32>
    %17 = vector.broadcast %cst_3 : f32 to vector<256x256xf32>
    %18 = arith.select %13, %16, %17 : vector<256x256xi1>, vector<256x256xf32>
    %cst_4 = arith.constant 1.000000e+00 : f32
    %19 = vector.broadcast %cst_4 : f32 to vector<256x256xf32>
    %20 = arith.cmpf oeq, %11, %19 : vector<256x256xf32>
    %c1 = arith.constant 1 : index
    %c0_5 = arith.constant 0 : index
    %21 = vector.load %arg8[%c1, %c0_5] : memref<8x256xf32, #tpu.memory_space<vmem>>, vector<1x256xf32>
    %cst_6 = arith.constant 0.000000e+00 : f32
    %22 = vector.shape_cast %21 : vector<1x256xf32> to vector<1x256xf32>
    %23 = vector.broadcast %22 : vector<1x256xf32> to vector<256x256xf32>
    %24 = vector.broadcast %cst_6 : f32 to vector<256x256xf32>
    %25 = arith.select %20, %23, %24 : vector<256x256xi1>, vector<256x256xf32>
    %26 = arith.addf %18, %25 : vector<256x256xf32>
    %cst_7 = arith.constant 1.600000e+01 : f32
    %27 = vector.broadcast %cst_7 : f32 to vector<256x256xf32>
    %28 = arith.cmpf oeq, %11, %27 : vector<256x256xf32>
    %c2 = arith.constant 2 : index
    %c0_8 = arith.constant 0 : index
    %29 = vector.load %arg8[%c2, %c0_8] : memref<8x256xf32, #tpu.memory_space<vmem>>, vector<1x256xf32>
    %cst_9 = arith.constant 0.000000e+00 : f32
    %30 = vector.shape_cast %29 : vector<1x256xf32> to vector<1x256xf32>
    %31 = vector.broadcast %30 : vector<1x256xf32> to vector<256x256xf32>
    %32 = vector.broadcast %cst_9 : f32 to vector<256x256xf32>
    %33 = arith.select %28, %31, %32 : vector<256x256xi1>, vector<256x256xf32>
    %34 = arith.addf %26, %33 : vector<256x256xf32>
    %cst_10 = arith.constant 1.700000e+01 : f32
    %35 = vector.broadcast %cst_10 : f32 to vector<256x256xf32>
    %36 = arith.cmpf oeq, %11, %35 : vector<256x256xf32>
    %c3 = arith.constant 3 : index
    %c0_11 = arith.constant 0 : index
    %37 = vector.load %arg8[%c3, %c0_11] : memref<8x256xf32, #tpu.memory_space<vmem>>, vector<1x256xf32>
    %cst_12 = arith.constant 0.000000e+00 : f32
    %38 = vector.shape_cast %37 : vector<1x256xf32> to vector<1x256xf32>
    %39 = vector.broadcast %38 : vector<1x256xf32> to vector<256x256xf32>
    %40 = vector.broadcast %cst_12 : f32 to vector<256x256xf32>
    %41 = arith.select %36, %39, %40 : vector<256x256xi1>, vector<256x256xf32>
    %42 = arith.addf %34, %41 : vector<256x256xf32>
    %c0_13 = arith.constant 0 : index
    %c0_14 = arith.constant 0 : index
    %43 = vector.load %arg7[%c0_13, %c0_14] : memref<4x256xf32, #tpu.memory_space<vmem>>, vector<4x256xf32>
    %c0_15 = arith.constant 0 : index
    %c0_16 = arith.constant 0 : index
    %c0_17 = arith.constant 0 : index
    %44 = vector.load %arg3[%c0_15, %c0_16, %c0_17] : memref<1x4x256xf32, #tpu.memory_space<vmem>>, vector<1x4x256xf32>
    %45 = vector.shape_cast %44 : vector<1x4x256xf32> to vector<4x256xf32>
    %cst_18 = arith.constant dense<0.000000e+00> : vector<4x256xf32>
    %46 = tpu.matmul %45, %42, %cst_18 {dimension_numbers = #tpu.dot_dimension_numbers<[1], [0], [0], [1], [0, 0, 1, 1], [], []>} : vector<4x256xf32>, vector<256x256xf32>, vector<4x256xf32> -> vector<4x256xf32>
    %47 = arith.addf %43, %46 : vector<4x256xf32>
    %c0_19 = arith.constant 0 : index
    %c0_20 = arith.constant 0 : index
    %48 = vector.load %arg7[%c0_19, %c0_20] : memref<4x256xf32, #tpu.memory_space<vmem>>, vector<4x256xf32>
    tpu.vector_store %arg7[%c0_19, %c0_20], %47 {strides = array<i32>} : memref<4x256xf32, #tpu.memory_space<vmem>>, vector<4x256xf32>,
    %c0_i32_21 = arith.constant 0 : i32
    %49 = arith.cmpi eq, %arg2, %c0_i32_21 : i32
    %50 = arith.extui %49 : i1 to i32
    %c0_i32_22 = arith.constant 0 : i32
    %51 = arith.cmpi ne, %50, %c0_i32_22 : i32
    scf.if %51 {
      %c5 = arith.constant 5 : index
      %c0_23 = arith.constant 0 : index
      %52 = vector.load %arg8[%c5, %c0_23] : memref<8x256xf32, #tpu.memory_space<vmem>>, vector<1x256xf32>
      %c0_24 = arith.constant 0 : index
      %c0_25 = arith.constant 0 : index
      %53 = vector.load %arg7[%c0_24, %c0_25] : memref<4x256xf32, #tpu.memory_space<vmem>>, vector<4x256xf32>
      %54 = vector.broadcast %52 : vector<1x256xf32> to vector<4x256xf32>
      %55 = arith.mulf %53, %54 : vector<4x256xf32>
      %c0_26 = arith.constant 0 : index
      %c0_27 = arith.constant 0 : index
      %c0_28 = arith.constant 0 : index
      %56 = vector.load %arg5[%c0_26, %c0_27, %c0_28] : memref<1x4x256xf32, #tpu.memory_space<vmem>>, vector<1x4x256xf32>
      %57 = vector.shape_cast %56 : vector<1x4x256xf32> to vector<4x256xf32>
      %58 = vector.shape_cast %55 : vector<4x256xf32> to vector<1x4x256xf32>
      tpu.vector_store %arg5[%c0_26, %c0_27, %c0_28], %58 {strides = array<i32>} : memref<1x4x256xf32, #tpu.memory_space<vmem>>, vector<1x4x256xf32>,
      %c0_29 = arith.constant 0 : index
      %c0_30 = arith.constant 0 : index
      %c0_31 = arith.constant 0 : index
      %59 = vector.load %arg6[%c0_29, %c0_30, %c0_31] : memref<1x1x256xf32, #tpu.memory_space<vmem>>, vector<1x1x256xf32>
      %60 = vector.shape_cast %59 : vector<1x1x256xf32> to vector<1x256xf32>
      %61 = vector.shape_cast %52 : vector<1x256xf32> to vector<1x1x256xf32>
      tpu.vector_store %arg6[%c0_29, %c0_30, %c0_31], %61 {strides = array<i32>} : memref<1x1x256xf32, #tpu.memory_space<vmem>>, vector<1x1x256xf32>,
    } else {
    }
    return
  }
  func.func @transform_0(%arg0: i32, %arg1: i32, %arg2: i32) -> (i32, i32, i32) {
    %c0_i32 = arith.constant 0 : i32
    %c0_i32_0 = arith.constant 0 : i32
    return %arg0, %c0_i32, %arg2 : i32, i32, i32
  }
  func.func @transform_1(%arg0: i32, %arg1: i32, %arg2: i32) -> (i32, i32, i32) {
    %c0_i32 = arith.constant 0 : i32
    %c0_i32_0 = arith.constant 0 : i32
    return %arg0, %c0_i32, %arg1 : i32, i32, i32
  }
  func.func @transform_2(%arg0: i32, %arg1: i32, %arg2: i32) -> (i32, i32, i32) {
    %c0_i32 = arith.constant 0 : i32
    %c0_i32_0 = arith.constant 0 : i32
    return %arg0, %c0_i32, %arg1 : i32, i32, i32
  }
  func.func @transform_3(%arg0: i32, %arg1: i32, %arg2: i32) -> (i32, i32, i32) {
    %c0_i32 = arith.constant 0 : i32
    %c0_i32_0 = arith.constant 0 : i32
    return %arg0, %c0_i32, %arg1 : i32, i32, i32
  }
}

</mosaic_0001>

<llo_original>
// kernel: tpu_custom_call.1
$region0: #{tpu_custom_call.1}
  #allocation0 [shape = 'u32[]', space=smem, size = 0x4, offset = 0x4, fixed_abs, tag = 'smem constant byte address 0x4 - core index']
  #allocation1 [shape = 'u32[72,128]{1,0:T(1,128)}', space=vmem, size = 0x9000, scoped, tag = 'internal scratch']
  #allocation2 [shape = 'f32[4,256]{1,0:T(4,128)}', space=vmem, size = 0x1000, scoped, tag = 'scratch operand']
  #allocation3 [shape = 'f32[8,256]{1,0:T(8,128)}', space=vmem, size = 0x2000, scoped, tag = 'scratch operand']
  %s0 = inlined_call_operand.hbm [shape: f32[2,4,256], index: 0, kind: input, shape index: {}]
  %s1 = inlined_call_operand.hbm [shape: f32[2,2,256], index: 1, kind: input, shape index: {}]
  %s2 = inlined_call_operand.hbm [shape: f32[2,4,256], index: 2, kind: output, shape index: {0}]
  %s3 = inlined_call_operand.hbm [shape: f32[2,1,256], index: 3, kind: output, shape index: {1}]
  %4 = xla_tuple %s2, %s3
  %s5 = sld [smem:[#allocation0]]
  $region65: #{tpu_custom_call.1} parent=0
    _
  %s7 = ssub.s32 1, %s5
  %s8 = scalar_select 0, %s7, %s5
  $region1: #{tpu_custom_call.1} parent=0
    #allocation4 [shape = 'u8[8192]{0}', space=vmem, size = 0x2000, scoped, tag = 'input window, operand 0']
    #allocation5 [shape = 's32[2]{0}', space=sflag, size = 0x8, scoped, tag = 'scoped memory for tpu_custom_call.1']
    #allocation6 [shape = 's32[2]{0}', space=sflag, size = 0x8, scoped, tag = 'scoped memory for tpu_custom_call.1']
    #allocation7 [shape = 'u8[4096]{0}', space=vmem, size = 0x1000, scoped, tag = 'input window, operand 1']
    #allocation8 [shape = 's32[2]{0}', space=sflag, size = 0x8, scoped, tag = 'scoped memory for tpu_custom_call.1']
    #allocation9 [shape = 'u8[8192]{0}', space=vmem, size = 0x2000, scoped, tag = 'output window, operand 0']
    #allocation10 [shape = 'u8[2048]{0}', space=vmem, size = 0x800, scoped, tag = 'output window, operand 1']
    #allocation11 [shape = 's32[2]{0}', space=sflag, size = 0x8, scoped, tag = 'scoped memory for tpu_custom_call.1']
    %9 = vsyncpa [#allocation5], 0
    %s10 = scalar_lea.sflag [#allocation5], 1
    %11 = vsyncpa %s10, 0
    %12 = vsyncpa [#allocation8], 0
    %s13 = scalar_lea.sflag [#allocation8], 1
    %14 = vsyncpa %s13, 0
    %15 = vsyncpa [#allocation6], 0
    %s16 = scalar_lea.sflag [#allocation6], 1
    %17 = vsyncpa %s16, 0
    %18 = vsyncpa [#allocation11], 0
    %s19 = scalar_lea.sflag [#allocation11], 1
    %20 = vsyncpa %s19, 0
    loop: start=0, step=1, limit=4
    $region2: #{tpu_custom_call.1} parent=1 // loop_pre_header
      _
    $region3: #{tpu_custom_call.1} parent=1 // loop_header
      %s22 = sphi 0, %s26
      %p23 = scmp.ge.s32.totalorder %s22, 4
      %s29 = sphi 0, %s48
      %s30 = sphi 0, %s44
      %s31 = sphi 0, %s40
      %s32 = sphi 0, %s29
      %s33 = sphi 0, %s30
      %s34 = sphi 0, %s31
      %s35 = sphi 0, %s32
      %s36 = sphi 0, %s33
      %s37 = sphi 0, %s34
      %s53 = sphi 0, %s55
      %s56 = sphi 0, %s53
      %s57 = sphi 0, %s56
      %s73 = sphi 0, %s57
      %s81 = sphi 0, %s83
      %s84 = sphi 0, %s81
      %s85 = sphi 0, %s84
      %s101 = sphi 0, %s85
      %s109 = sphi 0, %s111
      %s112 = sphi 0, %s109
      %s113 = sphi 0, %s112
      %s129 = sphi 0, %s113
      %s137 = sphi 0, %s139
      %s140 = sphi 0, %s137
      %s141 = sphi 0, %s140
      %s157 = sphi 0, %s141
    $region4: #{tpu_custom_call.1} parent=1 // loop_header_branch
      %25 = sbr.rel (%p23) target = $region8
    $region5: #{tpu_custom_call.1} parent=1 // loop_body
      %s27 = ssub.s32 %s22, 1
      %s28 = ssub.s32 %s22, 2
      %s38 = sadd.s32 1, %s31
      %p39 = scmp.ge.s32.totalorder %s38, 1
      %s40 = scalar_select %p39, 0, %s38
      %s41 = sadd.s32 1, %s30
      %s42 = scalar_select %p39, %s41, %s30
      %p43 = scmp.ge.s32.totalorder %s42, 1
      %s44 = scalar_select %p43, 0, %s42
      %s45 = sadd.s32 1, %s29
      %s46 = scalar_select %p43, %s45, %s29
      %p47 = scmp.ge.s32.totalorder %s46, 2
      %s48 = scalar_select %p47, 0, %s46
      %s49 = ssub.s32 %s29, %s48
      %s50 = ssub.s32 %s31, %s40
      %s51 = sor.u32 %s49, %s50
      %p52 = scmp.eq.s32.totalorder %s51, 0
      %s54 = sadd.s32 %s53, 1
      %s55 = scalar_select %p52, %s53, %s54
      %p58 = pneg %p52
      %p59 = scmp.eq.s32.totalorder %s22, 1
      %p60 = por %p58, %p59
      %p61 = scmp.ne.s32.totalorder %s53, %s56
      %p62 = scmp.eq.s32.totalorder %s22, 0
      %p63 = por %p61, %p62
      %p64 = scmp.ne.s32.totalorder %s53, %s56
      %p65 = scmp.eq.s32.totalorder %s27, 1
      %p66 = por %p64, %p65
      %p67 = scmp.ne.s32.totalorder %s56, %s57
      %p68 = scmp.eq.s32.totalorder %s27, 0
      %p69 = por %p67, %p68
      %p70 = scmp.ne.s32.totalorder %s56, %s57
      %p71 = scmp.eq.s32.totalorder %s28, 1
      %p72 = por %p70, %p71
      %p74 = scmp.ne.s32.totalorder %s57, %s73
      %p75 = scmp.eq.s32.totalorder %s28, 0
      %p76 = por %p74, %p75
      %s77 = ssub.s32 %s29, %s48
      %s78 = ssub.s32 %s30, %s44
      %s79 = sor.u32 %s77, %s78
      %p80 = scmp.eq.s32.totalorder %s79, 0
      %s82 = sadd.s32 %s81, 1
      %s83 = scalar_select %p80, %s81, %s82
      %p86 = pneg %p80
      %p87 = scmp.eq.s32.totalorder %s22, 1
      %p88 = por %p86, %p87
      %p89 = scmp.ne.s32.totalorder %s81, %s84
      %p90 = scmp.eq.s32.totalorder %s22, 0
      %p91 = por %p89, %p90
      %p92 = scmp.ne.s32.totalorder %s81, %s84
      %p93 = scmp.eq.s32.totalorder %s27, 1
      %p94 = por %p92, %p93
      %p95 = scmp.ne.s32.totalorder %s84, %s85
      %p96 = scmp.eq.s32.totalorder %s27, 0
      %p97 = por %p95, %p96
      %p98 = scmp.ne.s32.totalorder %s84, %s85
      %p99 = scmp.eq.s32.totalorder %s28, 1
      %p100 = por %p98, %p99
      %p102 = scmp.ne.s32.totalorder %s85, %s101
      %p103 = scmp.eq.s32.totalorder %s28, 0
      %p104 = por %p102, %p103
      %s105 = ssub.s32 %s29, %s48
      %s106 = ssub.s32 %s30, %s44
      %s107 = sor.u32 %s105, %s106
      %p108 = scmp.eq.s32.totalorder %s107, 0
      %s110 = sadd.s32 %s109, 1
      %s111 = scalar_select %p108, %s109, %s110
      %p114 = pneg %p108
      %p115 = scmp.eq.s32.totalorder %s22, 1
      %p116 = por %p114, %p115
      %p117 = scmp.ne.s32.totalorder %s109, %s112
      %p118 = scmp.eq.s32.totalorder %s22, 0
      %p119 = por %p117, %p118
      %p120 = scmp.ne.s32.totalorder %s109, %s112
      %p121 = scmp.eq.s32.totalorder %s27, 1
      %p122 = por %p120, %p121
      %p123 = scmp.ne.s32.totalorder %s112, %s113
      %p124 = scmp.eq.s32.totalorder %s27, 0
      %p125 = por %p123, %p124
      %p126 = scmp.ne.s32.totalorder %s112, %s113
      %p127 = scmp.eq.s32.totalorder %s28, 1
      %p128 = por %p126, %p127
      %p130 = scmp.ne.s32.totalorder %s113, %s129
      %p131 = scmp.eq.s32.totalorder %s28, 0
      %p132 = por %p130, %p131
      %s133 = ssub.s32 %s29, %s48
      %s134 = ssub.s32 %s30, %s44
      %s135 = sor.u32 %s133, %s134
      %p136 = scmp.eq.s32.totalorder %s135, 0
      %s138 = sadd.s32 %s137, 1
      %s139 = scalar_select %p136, %s137, %s138
      %p142 = pneg %p136
      %p143 = scmp.eq.s32.totalorder %s22, 1
      %p144 = por %p142, %p143
      %p145 = scmp.ne.s32.totalorder %s137, %s140
      %p146 = scmp.eq.s32.totalorder %s22, 0
      %p147 = por %p145, %p146
      %p148 = scmp.ne.s32.totalorder %s137, %s140
      %p149 = scmp.eq.s32.totalorder %s27, 1
      %p150 = por %p148, %p149
      %p151 = scmp.ne.s32.totalorder %s140, %s141
      %p152 = scmp.eq.s32.totalorder %s27, 0
      %p153 = por %p151, %p152
      %p154 = scmp.ne.s32.totalorder %s140, %s141
      %p155 = scmp.eq.s32.totalorder %s28, 1
      %p156 = por %p154, %p155
      %p158 = scmp.ne.s32.totalorder %s141, %s157
      %p159 = scmp.eq.s32.totalorder %s28, 0
      %p160 = por %p158, %p159
      %p161 = scmp.le.s32.totalorder 1, %s22
      %p162 = scmp.lt.s32.totalorder %s22, 3
      %p163 = pnand %p161, %p162
      %p164 = pneg %p163
      // Predicated region
      $region9: #{tpu_custom_call.1} parent=5 // pred_check
        _
      $region10: #{tpu_custom_call.1} parent=5 // pred_check_branch
        %166 = sbr.rel (%p163) target = $region12
      $region11: #{tpu_custom_call.1} parent=5 // pred_region
        %s167 = ssub.s32 %s22, 1
      $region12: #{tpu_custom_call.1} parent=5 // pred_fallthru
        _
      %p168 = scmp.lt.s32.totalorder %s22, 2
      // Predicated region
      $region13: #{tpu_custom_call.1} parent=5 // pred_check
        %p169 = pneg %p168
      $region14: #{tpu_custom_call.1} parent=5 // pred_check_branch
        %171 = sbr.rel (%p169) target = $region16
      $region15: #{tpu_custom_call.1} parent=5 // pred_region
        // Predicated region
        $region17: #{tpu_custom_call.1} parent=15 // pred_check
          %p172 = pneg %p63
        $region18: #{tpu_custom_call.1} parent=15 // pred_check_branch
          %174 = sbr.rel (%p172) target = $region20
        $region19: #{tpu_custom_call.1} parent=15 // pred_region
          %s175 = sand.u32 %s53, 1
          %s176 = scalar_lea.sflag [#allocation5], %s175
          %s177 = sand.u32 %s53, 1
          %s178 = smul.addr %s177, 8
          %s179 = scalar_lea.vmem [#allocation4], %s178
          %s180 = smul.u32 2, %s31
          %182 = vsyncadd %s176, 0
          %s183 = smul.addr %s29, 2
          %s184 = sadd.s32 %s180, %s183
          %s185 = smul.addr %s184, 4
          %s186 = scalar_lea.hbm %s0, %s185
          %s188 = sshll.u32 %s186, 4
          %s189 = int_to_ptr.hbm [resolvable:$true] %s188
          %s190 = sshll.u32 %s179, 4
          %s191 = int_to_ptr.vmem [resolvable:$true] %s190
          %193 = dma.hbm_to_vmem [thread:$0]  %s189, 128, %s191, %s176
        $region20: #{tpu_custom_call.1} parent=15 // pred_fallthru
          _
        // Predicated region
        $region21: #{tpu_custom_call.1} parent=15 // pred_check
          %p194 = pneg %p91
        $region22: #{tpu_custom_call.1} parent=15 // pred_check_branch
          %196 = sbr.rel (%p194) target = $region24
        $region23: #{tpu_custom_call.1} parent=15 // pred_region
          %s197 = sand.u32 %s81, 1
          %s198 = scalar_lea.sflag [#allocation8], %s197
          %s199 = sand.u32 %s81, 1
          %s200 = smul.addr %s199, 4
          %s201 = scalar_lea.vmem [#allocation7], %s200
          %s202 = smul.u32 2, %s30
          %204 = vsyncadd %s198, 0
          %s205 = smul.addr %s29, 2
          %s206 = sadd.s32 %s202, %s205
          %s207 = smul.addr %s206, 2
          %s208 = scalar_lea.hbm %s1, %s207
          %s210 = sshll.u32 %s208, 4
          %s211 = int_to_ptr.hbm [resolvable:$true] %s210
          %s212 = sshll.u32 %s201, 4
          %s213 = int_to_ptr.vmem [resolvable:$true] %s212
          %215 = dma.hbm_to_vmem [thread:$0]  %s211, 64, %s213, %s198
        $region24: #{tpu_custom_call.1} parent=15 // pred_fallthru
          _
      $region16: #{tpu_custom_call.1} parent=5 // pred_fallthru
        _
      %p216 = scmp.le.s32.totalorder 1, %s22
      %p217 = scmp.lt.s32.totalorder %s22, 3
      %p218 = pnand %p216, %p217
      %p219 = pneg %p218
      // Predicated region
      $region25: #{tpu_custom_call.1} parent=5 // pred_check
        _
      $region26: #{tpu_custom_call.1} parent=5 // pred_check_branch
        %221 = sbr.rel (%p218) target = $region28
      $region27: #{tpu_custom_call.1} parent=5 // pred_region
        %s222 = ssub.s32 %s22, 1
        %s223 = sand.u32 %s56, 1
        %s224 = scalar_lea.sflag [#allocation5], %s223
        %s225 = sand.u32 %s56, 1
        %s226 = smul.addr %s225, 8
        %s227 = scalar_lea.vmem [#allocation4], %s226
        // Predicated region
        $region29: #{tpu_custom_call.1} parent=27 // pred_check
          %p228 = pneg %p69
        $region30: #{tpu_custom_call.1} parent=27 // pred_check_branch
          %230 = sbr.rel (%p228) target = $region32
        $region31: #{tpu_custom_call.1} parent=27 // pred_region
          %232 = dma.done %s224, 128
        $region32: #{tpu_custom_call.1} parent=27 // pred_fallthru
          _
        %s233 = sand.u32 %s84, 1
        %s234 = scalar_lea.sflag [#allocation8], %s233
        %s235 = sand.u32 %s84, 1
        %s236 = smul.addr %s235, 4
        %s237 = scalar_lea.vmem [#allocation7], %s236
        // Predicated region
        $region33: #{tpu_custom_call.1} parent=27 // pred_check
          %p238 = pneg %p97
        $region34: #{tpu_custom_call.1} parent=27 // pred_check_branch
          %240 = sbr.rel (%p238) target = $region36
        $region35: #{tpu_custom_call.1} parent=27 // pred_region
          %242 = dma.done %s234, 64
        $region36: #{tpu_custom_call.1} parent=27 // pred_fallthru
          _
        %s243 = sand.u32 %s56, 1
        %s244 = scalar_lea.sflag [#allocation5], %s243
        %s245 = sand.u32 %s56, 1
        %s246 = smul.addr %s245, 8
        %s247 = scalar_lea.vmem [#allocation4], %s246
        %p248 = pneg %p69
        %p249 = pneg %p66
        %s250 = sand.u32 %s84, 1
        %s251 = scalar_lea.sflag [#allocation8], %s250
        %s252 = sand.u32 %s84, 1
        %s253 = smul.addr %s252, 4
        %s254 = scalar_lea.vmem [#allocation7], %s253
        %p255 = pneg %p97
        %p256 = pneg %p94
        %p257 = pneg %p125
        %p258 = pneg %p122
        %s259 = sand.u32 %s112, 1
        %s260 = scalar_lea.sflag [#allocation6], %s259
        %s261 = sand.u32 %s112, 1
        %s262 = smul.addr %s261, 8
        %s263 = scalar_lea.vmem [#allocation9], %s262
        %p264 = pneg %p153
        %p265 = pneg %p150
        %s266 = sand.u32 %s140, 1
        %s267 = scalar_lea.sflag [#allocation11], %s266
        %s268 = sand.u32 %s140, 1
        %s269 = smul.addr %s268, 2
        %s270 = scalar_lea.vmem [#allocation10], %s269
        %s271 = smul.u32 2, %s34
        %s272 = smul.u32 2, %s33
        %s273 = smul.u32 2, %s33
        %s274 = smul.u32 2, %s33
        %p275 = scmp.eq.s32.totalorder %s34, 0
        // Predicated region
        $region37: #{tpu_custom_call.1} parent=27 // pred_check
          %p276 = pneg %p275
        $region38: #{tpu_custom_call.1} parent=27 // pred_check_branch
          %278 = sbr.rel (%p276) target = $region40
        $region39: #{tpu_custom_call.1} parent=27 // pred_region
          %v279 = vld [vmem:[%s237] sm:$0xf]
          %v280 = vmul.f32 %v279, 2.0
          %v281 = vrcp.pop 15.0
          %v282 = vmul.f32 15.0, %v281
          %v283 = vsub.f32 1.0, %v282
          %v284 = vmul.f32 %v281, %v283
          %v285 = vadd.f32 %v281, %v284
          %vm286 = vweird.f32 %v281
          %v287 = vsel %vm286, %v281, %v285
          %v288 = vmul.f32 %v280, %v287
          %v289 = vsub.f32 %v288, 1.0
          %v290 = vadd.f32 %v289, 1.0
          %v291 = vmul.f32 %v290, 16.0
          %v292 = vsub.f32 %v291, 1.0
          %v293 = vmul.f32 %v292, 0.5
          %v294 = vfloor.f32 %v293
          %v295 = vsub.f32 %v293, %v294
          %v296 = vsub.f32 1.0, %v295
          %v297 = vcvt.f32.s32.to.zero.pseudo %v294
          %v298 = vadd.s32 %v297, 1
          %v300 = vrot.slane %v296, 7
          %v301 = vrot.slane %v300, 2
          %v303 = vmul.f32 %v296, %v301
          %vm304 = vcmp.ge.s32.totalorder %v297, 0
          %vm305 = vcmp.lt.s32.totalorder %v297, 16
          %vm306 = vmand %vm304, %vm305
          %v307 = vsel %vm304, 1, 0
          %v308 = vrot.slane %v307, 7
          %v309 = vrot.slane %v308, 2
          %vm310 = vcmp.ne.s32.totalorder %v309, 0
          %vm311 = vmand %vm306, %vm310
          %v312 = vsel %vm305, 1, 0
          %v313 = vrot.slane %v312, 7
          %v314 = vrot.slane %v313, 2
          %vm315 = vcmp.ne.s32.totalorder %v314, 0
          %vm316 = vmand %vm311, %vm315
          %v317 = vsel %vm316, %v303, 0.0
          %v318 = vmul.f32 %v295, %v301
          %vm319 = vcmp.ge.s32.totalorder %v298, 0
          %vm320 = vcmp.lt.s32.totalorder %v298, 16
          %vm321 = vmand %vm319, %vm320
          %vm322 = vmand %vm321, %vm310
          %vm323 = vmand %vm322, %vm315
          %v324 = vsel %vm323, %v318, 0.0
          %v326 = vrot.slane %v295, 7
          %v327 = vrot.slane %v326, 2
          %v329 = vmul.f32 %v296, %v327
          %v330 = vsel %vm319, 1, 0
          %v331 = vrot.slane %v330, 7
          %v332 = vrot.slane %v331, 2
          %vm333 = vcmp.ne.s32.totalorder %v332, 0
          %vm334 = vmand %vm306, %vm333
          %v335 = vsel %vm320, 1, 0
          %v336 = vrot.slane %v335, 7
          %v337 = vrot.slane %v336, 2
          %vm338 = vcmp.ne.s32.totalorder %v337, 0
          %vm339 = vmand %vm334, %vm338
          %v340 = vsel %vm339, %v329, 0.0
          %v341 = vmul.f32 %v295, %v327
          %vm342 = vmand %vm321, %vm333
          %vm343 = vmand %vm342, %vm338
          %v344 = vsel %vm343, %v341, 0.0
          %v345 = vand.u32 2147483647, %v289
          %vm346 = vcmp.lt.f32.partialorder %v345, 1.0
          %v347 = vsel %vm346, 1, 0
          %v348 = vrot.slane %v347, 7
          %v349 = vrot.slane %v348, 2
          %vm350 = vcmp.ne.s32.totalorder %v349, 0
          %vm351 = vmand %vm346, %vm350
          %v353 = vrot.slane %v317, 1
          %v354 = vrot.slane %v317, 2
          %v355 = vrot.slane %v317, 3
          %vm356 = vcmask 1040384
          %v357 = vsel %vm356, %v317, %v353
          %vm358 = vcmask 1042434
          %v359 = vsel %vm358, %v354, %v355
          %vm360 = vcmask 1041408
          %v361 = vsel %vm360, %v357, %v359
          %v363 = vlaneseq
          %vm364 = vcmp.ge.s32.totalorder %v363, 0
          %vm365 = vcmp.lt.s32.totalorder %v363, 256
          %vm366 = vmand %vm364, %vm365
          %367 = vst.msk [vmem:[#allocation3] ss:$8 sm:$0x3] %vm366, %v361
          %368 = vst.msk [vmem:[#allocation3] ss:$8 sm:$0x0] %vm366, %v361
          %v370 = vrot.slane %v324, 1
          %v371 = vrot.slane %v324, 2
          %v372 = vrot.slane %v324, 3
          %v373 = vsel %vm356, %v324, %v370
          %v374 = vsel %vm358, %v371, %v372
          %v375 = vsel %vm360, %v373, %v374
          %s377 = scalar_lea.vmem [#allocation3], 1
          %378 = vst.msk [vmem:[%s377] ss:$8 sm:$0x3] %vm366, %v375
          %379 = vst.msk [vmem:[%s377] ss:$8 sm:$0x0] %vm366, %v375
          %v381 = vrot.slane %v340, 1
          %v382 = vrot.slane %v340, 2
          %v383 = vrot.slane %v340, 3
          %v384 = vsel %vm356, %v340, %v381
          %v385 = vsel %vm358, %v382, %v383
          %v386 = vsel %vm360, %v384, %v385
          %s388 = scalar_lea.vmem [#allocation3], 2
          %389 = vst.msk [vmem:[%s388] ss:$8 sm:$0x3] %vm366, %v386
          %390 = vst.msk [vmem:[%s388] ss:$8 sm:$0x0] %vm366, %v386
          %v392 = vrot.slane %v344, 1
          %v393 = vrot.slane %v344, 2
          %v394 = vrot.slane %v344, 3
          %v395 = vsel %vm356, %v344, %v392
          %v396 = vsel %vm358, %v393, %v394
          %v397 = vsel %vm360, %v395, %v396
          %s399 = scalar_lea.vmem [#allocation3], 3
          %400 = vst.msk [vmem:[%s399] ss:$8 sm:$0x3] %vm366, %v397
          %401 = vst.msk [vmem:[%s399] ss:$8 sm:$0x0] %vm366, %v397
          %v402 = vmul.u32 %v297, 16
          %v403 = vrot.slane %v297, 7
          %v404 = vadd.s32 %v402, %v403
          %v405 = vcvt.s32.f32 %v404
          %407 = vst [vmem:[#allocation1] sm:$0xff] %v405
          %s408 = scalar_lea.vmem [#allocation1], 1
          %v409 = vld [vmem:[%s408] ss:$2 sm:$0xff]
          %s411 = scalar_lea.vmem [#allocation3], 4
          %412 = vst.msk [vmem:[%s411] ss:$8 sm:$0x3] %vm366, %v409
          %413 = vst.msk [vmem:[%s411] ss:$8 sm:$0x0] %vm366, %v409
          %v414 = vsel %vm351, 1, 0
          %v415 = vcvt.s32.f32 %v414
          %v417 = vrot.slane %v415, 1
          %v418 = vrot.slane %v415, 2
          %v419 = vrot.slane %v415, 3
          %v420 = vsel %vm356, %v415, %v417
          %v421 = vsel %vm358, %v418, %v419
          %v422 = vsel %vm360, %v420, %v421
          %s424 = scalar_lea.vmem [#allocation3], 5
          %425 = vst.msk [vmem:[%s424] ss:$8 sm:$0x3] %vm366, %v422
          %426 = vst.msk [vmem:[%s424] ss:$8 sm:$0x0] %vm366, %v422
          %427 = vst [vmem:[#allocation2] sm:$0xff] 0.0
        $region40: #{tpu_custom_call.1} parent=27 // pred_fallthru
          _
        %s428 = scalar_lea.vmem [#allocation3], 4
        %v429 = vld [vmem:[%s428] ss:$8 sm:$0x3]
        %s430 = smul.u32 %s34, 256
        %s431 = scvt.s32.f32 %s430
        %v432 = vlaneseq
        %v433 = vshrl.u32 %v432, 7
        %v434 = vadd.s32 %v433, 8
        %v435 = vadd.s32 %v433, 16
        %v436 = vadd.s32 %v433, 24
        %v437 = vadd.s32 %v433, 32
        %v438 = vadd.s32 %v433, 40
        %v439 = vadd.s32 %v433, 48
        %v440 = vadd.s32 %v433, 56
        %v441 = vadd.s32 %v433, 64
        %v442 = vadd.s32 %v433, 72
        %v443 = vadd.s32 %v433, 80
        %v444 = vadd.s32 %v433, 88
        %v445 = vadd.s32 %v433, 96
        %v446 = vadd.s32 %v433, 104
        %v447 = vadd.s32 %v433, 112
        %v448 = vadd.s32 %v433, 120
        %v449 = vadd.s32 %v433, 128
        %v450 = vadd.s32 %v433, 136
        %v451 = vadd.s32 %v433, 144
        %v452 = vadd.s32 %v433, 152
        %v453 = vadd.s32 %v433, 160
        %v454 = vadd.s32 %v433, 168
        %v455 = vadd.s32 %v433, 176
        %v456 = vadd.s32 %v433, 184
        %v457 = vadd.s32 %v433, 192
        %v458 = vadd.s32 %v433, 200
        %v459 = vadd.s32 %v433, 208
        %v460 = vadd.s32 %v433, 216
        %v461 = vadd.s32 %v433, 224
        %v462 = vadd.s32 %v433, 232
        %v463 = vadd.s32 %v433, 240
        %v464 = vadd.s32 %v433, 248
        %v465 = vcvt.s32.f32 %v433
        %v466 = vcvt.s32.f32 %v434
        %v467 = vcvt.s32.f32 %v435
        %v468 = vcvt.s32.f32 %v436
        %v469 = vcvt.s32.f32 %v437
        %v470 = vcvt.s32.f32 %v438
        %v471 = vcvt.s32.f32 %v439
        %v472 = vcvt.s32.f32 %v440
        %v473 = vcvt.s32.f32 %v441
        %v474 = vcvt.s32.f32 %v442
        %v475 = vcvt.s32.f32 %v443
        %v476 = vcvt.s32.f32 %v444
        %v477 = vcvt.s32.f32 %v445
        %v478 = vcvt.s32.f32 %v446
        %v479 = vcvt.s32.f32 %v447
        %v480 = vcvt.s32.f32 %v448
        %v481 = vcvt.s32.f32 %v449
        %v482 = vcvt.s32.f32 %v450
        %v483 = vcvt.s32.f32 %v451
        %v484 = vcvt.s32.f32 %v452
        %v485 = vcvt.s32.f32 %v453
        %v486 = vcvt.s32.f32 %v454
        %v487 = vcvt.s32.f32 %v455
        %v488 = vcvt.s32.f32 %v456
        %v489 = vcvt.s32.f32 %v457
        %v490 = vcvt.s32.f32 %v458
        %v491 = vcvt.s32.f32 %v459
        %v492 = vcvt.s32.f32 %v460
        %v493 = vcvt.s32.f32 %v461
        %v494 = vcvt.s32.f32 %v462
        %v495 = vcvt.s32.f32 %v463
        %v496 = vcvt.s32.f32 %v464
        %v497 = vstv %s431
        %v498 = vadd.f32 %v497, %v465
        %v499 = vadd.f32 %v497, %v466
        %v500 = vadd.f32 %v497, %v467
        %v501 = vadd.f32 %v497, %v468
        %v502 = vadd.f32 %v497, %v469
        %v503 = vadd.f32 %v497, %v470
        %v504 = vadd.f32 %v497, %v471
        %v505 = vadd.f32 %v497, %v472
        %v506 = vadd.f32 %v497, %v473
        %v507 = vadd.f32 %v497, %v474
        %v508 = vadd.f32 %v497, %v475
        %v509 = vadd.f32 %v497, %v476
        %v510 = vadd.f32 %v497, %v477
        %v511 = vadd.f32 %v497, %v478
        %v512 = vadd.f32 %v497, %v479
        %v513 = vadd.f32 %v497, %v480
        %v514 = vadd.f32 %v497, %v481
        %v515 = vadd.f32 %v497, %v482
        %v516 = vadd.f32 %v497, %v483
        %v517 = vadd.f32 %v497, %v484
        %v518 = vadd.f32 %v497, %v485
        %v519 = vadd.f32 %v497, %v486
        %v520 = vadd.f32 %v497, %v487
        %v521 = vadd.f32 %v497, %v488
        %v522 = vadd.f32 %v497, %v489
        %v523 = vadd.f32 %v497, %v490
        %v524 = vadd.f32 %v497, %v491
        %v525 = vadd.f32 %v497, %v492
        %v526 = vadd.f32 %v497, %v493
        %v527 = vadd.f32 %v497, %v494
        %v528 = vadd.f32 %v497, %v495
        %v529 = vadd.f32 %v497, %v496
        %v531 = vperm.slane %v429, 0
        %v532 = vperm.slane %v429, 1
        %v535 = vsub.f32 %v498, %v531
        %v536 = vsub.f32 %v498, %v532
        %v537 = vsub.f32 %v499, %v531
        %v538 = vsub.f32 %v499, %v532
        %v539 = vsub.f32 %v500, %v531
        %v540 = vsub.f32 %v500, %v532
        %v541 = vsub.f32 %v501, %v531
        %v542 = vsub.f32 %v501, %v532
        %v543 = vsub.f32 %v502, %v531
        %v544 = vsub.f32 %v502, %v532
        %v545 = vsub.f32 %v503, %v531
        %v546 = vsub.f32 %v503, %v532
        %v547 = vsub.f32 %v504, %v531
        %v548 = vsub.f32 %v504, %v532
        %v549 = vsub.f32 %v505, %v531
        %v550 = vsub.f32 %v505, %v532
        %v551 = vsub.f32 %v506, %v531
        %v552 = vsub.f32 %v506, %v532
        %v553 = vsub.f32 %v507, %v531
        %v554 = vsub.f32 %v507, %v532
        %v555 = vsub.f32 %v508, %v531
        %v556 = vsub.f32 %v508, %v532
        %v557 = vsub.f32 %v509, %v531
        %v558 = vsub.f32 %v509, %v532
        %v559 = vsub.f32 %v510, %v531
        %v560 = vsub.f32 %v510, %v532
        %v561 = vsub.f32 %v511, %v531
        %v562 = vsub.f32 %v511, %v532
        %v563 = vsub.f32 %v512, %v531
        %v564 = vsub.f32 %v512, %v532
        %v565 = vsub.f32 %v513, %v531
        %v566 = vsub.f32 %v513, %v532
        %v567 = vsub.f32 %v514, %v531
        %v568 = vsub.f32 %v514, %v532
        %v569 = vsub.f32 %v515, %v531
        %v570 = vsub.f32 %v515, %v532
        %v571 = vsub.f32 %v516, %v531
        %v572 = vsub.f32 %v516, %v532
        %v573 = vsub.f32 %v517, %v531
        %v574 = vsub.f32 %v517, %v532
        %v575 = vsub.f32 %v518, %v531
        %v576 = vsub.f32 %v518, %v532
        %v577 = vsub.f32 %v519, %v531
        %v578 = vsub.f32 %v519, %v532
        %v579 = vsub.f32 %v520, %v531
        %v580 = vsub.f32 %v520, %v532
        %v581 = vsub.f32 %v521, %v531
        %v582 = vsub.f32 %v521, %v532
        %v583 = vsub.f32 %v522, %v531
        %v584 = vsub.f32 %v522, %v532
        %v585 = vsub.f32 %v523, %v531
        %v586 = vsub.f32 %v523, %v532
        %v587 = vsub.f32 %v524, %v531
        %v588 = vsub.f32 %v524, %v532
        %v589 = vsub.f32 %v525, %v531
        %v590 = vsub.f32 %v525, %v532
        %v591 = vsub.f32 %v526, %v531
        %v592 = vsub.f32 %v526, %v532
        %v593 = vsub.f32 %v527, %v531
        %v594 = vsub.f32 %v527, %v532
        %v595 = vsub.f32 %v528, %v531
        %v596 = vsub.f32 %v528, %v532
        %v597 = vsub.f32 %v529, %v531
        %v598 = vsub.f32 %v529, %v532
        %vm599 = vcmp.eq.f32.partialorder %v535, 0.0
        %vm600 = vcmp.eq.f32.partialorder %v536, 0.0
        %vm601 = vcmp.eq.f32.partialorder %v537, 0.0
        %vm602 = vcmp.eq.f32.partialorder %v538, 0.0
        %vm603 = vcmp.eq.f32.partialorder %v539, 0.0
        %vm604 = vcmp.eq.f32.partialorder %v540, 0.0
        %vm605 = vcmp.eq.f32.partialorder %v541, 0.0
        %vm606 = vcmp.eq.f32.partialorder %v542, 0.0
        %vm607 = vcmp.eq.f32.partialorder %v543, 0.0
        %vm608 = vcmp.eq.f32.partialorder %v544, 0.0
        %vm609 = vcmp.eq.f32.partialorder %v545, 0.0
        %vm610 = vcmp.eq.f32.partialorder %v546, 0.0
        %vm611 = vcmp.eq.f32.partialorder %v547, 0.0
        %vm612 = vcmp.eq.f32.partialorder %v548, 0.0
        %vm613 = vcmp.eq.f32.partialorder %v549, 0.0
        %vm614 = vcmp.eq.f32.partialorder %v550, 0.0
        %vm615 = vcmp.eq.f32.partialorder %v551, 0.0
        %vm616 = vcmp.eq.f32.partialorder %v552, 0.0
        %vm617 = vcmp.eq.f32.partialorder %v553, 0.0
        %vm618 = vcmp.eq.f32.partialorder %v554, 0.0
        %vm619 = vcmp.eq.f32.partialorder %v555, 0.0
        %vm620 = vcmp.eq.f32.partialorder %v556, 0.0
        %vm621 = vcmp.eq.f32.partialorder %v557, 0.0
        %vm622 = vcmp.eq.f32.partialorder %v558, 0.0
        %vm623 = vcmp.eq.f32.partialorder %v559, 0.0
        %vm624 = vcmp.eq.f32.partialorder %v560, 0.0
        %vm625 = vcmp.eq.f32.partialorder %v561, 0.0
        %vm626 = vcmp.eq.f32.partialorder %v562, 0.0
        %vm627 = vcmp.eq.f32.partialorder %v563, 0.0
        %vm628 = vcmp.eq.f32.partialorder %v564, 0.0
        %vm629 = vcmp.eq.f32.partialorder %v565, 0.0
        %vm630 = vcmp.eq.f32.partialorder %v566, 0.0
        %vm631 = vcmp.eq.f32.partialorder %v567, 0.0
        %vm632 = vcmp.eq.f32.partialorder %v568, 0.0
        %vm633 = vcmp.eq.f32.partialorder %v569, 0.0
        %vm634 = vcmp.eq.f32.partialorder %v570, 0.0
        %vm635 = vcmp.eq.f32.partialorder %v571, 0.0
        %vm636 = vcmp.eq.f32.partialorder %v572, 0.0
        %vm637 = vcmp.eq.f32.partialorder %v573, 0.0
        %vm638 = vcmp.eq.f32.partialorder %v574, 0.0
        %vm639 = vcmp.eq.f32.partialorder %v575, 0.0
        %vm640 = vcmp.eq.f32.partialorder %v576, 0.0
        %vm641 = vcmp.eq.f32.partialorder %v577, 0.0
        %vm642 = vcmp.eq.f32.partialorder %v578, 0.0
        %vm643 = vcmp.eq.f32.partialorder %v579, 0.0
        %vm644 = vcmp.eq.f32.partialorder %v580, 0.0
        %vm645 = vcmp.eq.f32.partialorder %v581, 0.0
        %vm646 = vcmp.eq.f32.partialorder %v582, 0.0
        %vm647 = vcmp.eq.f32.partialorder %v583, 0.0
        %vm648 = vcmp.eq.f32.partialorder %v584, 0.0
        %vm649 = vcmp.eq.f32.partialorder %v585, 0.0
        %vm650 = vcmp.eq.f32.partialorder %v586, 0.0
        %vm651 = vcmp.eq.f32.partialorder %v587, 0.0
        %vm652 = vcmp.eq.f32.partialorder %v588, 0.0
        %vm653 = vcmp.eq.f32.partialorder %v589, 0.0
        %vm654 = vcmp.eq.f32.partialorder %v590, 0.0
        %vm655 = vcmp.eq.f32.partialorder %v591, 0.0
        %vm656 = vcmp.eq.f32.partialorder %v592, 0.0
        %vm657 = vcmp.eq.f32.partialorder %v593, 0.0
        %vm658 = vcmp.eq.f32.partialorder %v594, 0.0
        %vm659 = vcmp.eq.f32.partialorder %v595, 0.0
        %vm660 = vcmp.eq.f32.partialorder %v596, 0.0
        %vm661 = vcmp.eq.f32.partialorder %v597, 0.0
        %vm662 = vcmp.eq.f32.partialorder %v598, 0.0
        %v663 = vld [vmem:[#allocation3] ss:$8 sm:$0x3]
        %v665 = vperm.slane %v663, 0
        %v666 = vperm.slane %v663, 1
        %v669 = vsel %vm599, %v665, 0.0
        %v670 = vsel %vm600, %v666, 0.0
        %v671 = vsel %vm601, %v665, 0.0
        %v672 = vsel %vm602, %v666, 0.0
        %v673 = vsel %vm603, %v665, 0.0
        %v674 = vsel %vm604, %v666, 0.0
        %v675 = vsel %vm605, %v665, 0.0
        %v676 = vsel %vm606, %v666, 0.0
        %v677 = vsel %vm607, %v665, 0.0
        %v678 = vsel %vm608, %v666, 0.0
        %v679 = vsel %vm609, %v665, 0.0
        %v680 = vsel %vm610, %v666, 0.0
        %v681 = vsel %vm611, %v665, 0.0
        %v682 = vsel %vm612, %v666, 0.0
        %v683 = vsel %vm613, %v665, 0.0
        %v684 = vsel %vm614, %v666, 0.0
        %v685 = vsel %vm615, %v665, 0.0
        %v686 = vsel %vm616, %v666, 0.0
        %v687 = vsel %vm617, %v665, 0.0
        %v688 = vsel %vm618, %v666, 0.0
        %v689 = vsel %vm619, %v665, 0.0
        %v690 = vsel %vm620, %v666, 0.0
        %v691 = vsel %vm621, %v665, 0.0
        %v692 = vsel %vm622, %v666, 0.0
        %v693 = vsel %vm623, %v665, 0.0
        %v694 = vsel %vm624, %v666, 0.0
        %v695 = vsel %vm625, %v665, 0.0
        %v696 = vsel %vm626, %v666, 0.0
        %v697 = vsel %vm627, %v665, 0.0
        %v698 = vsel %vm628, %v666, 0.0
        %v699 = vsel %vm629, %v665, 0.0
        %v700 = vsel %vm630, %v666, 0.0
        %v701 = vsel %vm631, %v665, 0.0
        %v702 = vsel %vm632, %v666, 0.0
        %v703 = vsel %vm633, %v665, 0.0
        %v704 = vsel %vm634, %v666, 0.0
        %v705 = vsel %vm635, %v665, 0.0
        %v706 = vsel %vm636, %v666, 0.0
        %v707 = vsel %vm637, %v665, 0.0
        %v708 = vsel %vm638, %v666, 0.0
        %v709 = vsel %vm639, %v665, 0.0
        %v710 = vsel %vm640, %v666, 0.0
        %v711 = vsel %vm641, %v665, 0.0
        %v712 = vsel %vm642, %v666, 0.0
        %v713 = vsel %vm643, %v665, 0.0
        %v714 = vsel %vm644, %v666, 0.0
        %v715 = vsel %vm645, %v665, 0.0
        %v716 = vsel %vm646, %v666, 0.0
        %v717 = vsel %vm647, %v665, 0.0
        %v718 = vsel %vm648, %v666, 0.0
        %v719 = vsel %vm649, %v665, 0.0
        %v720 = vsel %vm650, %v666, 0.0
        %v721 = vsel %vm651, %v665, 0.0
        %v722 = vsel %vm652, %v666, 0.0
        %v723 = vsel %vm653, %v665, 0.0
        %v724 = vsel %vm654, %v666, 0.0
        %v725 = vsel %vm655, %v665, 0.0
        %v726 = vsel %vm656, %v666, 0.0
        %v727 = vsel %vm657, %v665, 0.0
        %v728 = vsel %vm658, %v666, 0.0
        %v729 = vsel %vm659, %v665, 0.0
        %v730 = vsel %vm660, %v666, 0.0
        %v731 = vsel %vm661, %v665, 0.0
        %v732 = vsel %vm662, %v666, 0.0
        %vm733 = vcmp.eq.f32.partialorder %v535, 1.0
        %vm734 = vcmp.eq.f32.partialorder %v536, 1.0
        %vm735 = vcmp.eq.f32.partialorder %v537, 1.0
        %vm736 = vcmp.eq.f32.partialorder %v538, 1.0
        %vm737 = vcmp.eq.f32.partialorder %v539, 1.0
        %vm738 = vcmp.eq.f32.partialorder %v540, 1.0
        %vm739 = vcmp.eq.f32.partialorder %v541, 1.0
        %vm740 = vcmp.eq.f32.partialorder %v542, 1.0
        %vm741 = vcmp.eq.f32.partialorder %v543, 1.0
        %vm742 = vcmp.eq.f32.partialorder %v544, 1.0
        %vm743 = vcmp.eq.f32.partialorder %v545, 1.0
        %vm744 = vcmp.eq.f32.partialorder %v546, 1.0
        %vm745 = vcmp.eq.f32.partialorder %v547, 1.0
        %vm746 = vcmp.eq.f32.partialorder %v548, 1.0
        %vm747 = vcmp.eq.f32.partialorder %v549, 1.0
        %vm748 = vcmp.eq.f32.partialorder %v550, 1.0
        %vm749 = vcmp.eq.f32.partialorder %v551, 1.0
        %vm750 = vcmp.eq.f32.partialorder %v552, 1.0
        %vm751 = vcmp.eq.f32.partialorder %v553, 1.0
        %vm752 = vcmp.eq.f32.partialorder %v554, 1.0
        %vm753 = vcmp.eq.f32.partialorder %v555, 1.0
        %vm754 = vcmp.eq.f32.partialorder %v556, 1.0
        %vm755 = vcmp.eq.f32.partialorder %v557, 1.0
        %vm756 = vcmp.eq.f32.partialorder %v558, 1.0
        %vm757 = vcmp.eq.f32.partialorder %v559, 1.0
        %vm758 = vcmp.eq.f32.partialorder %v560, 1.0
        %vm759 = vcmp.eq.f32.partialorder %v561, 1.0
        %vm760 = vcmp.eq.f32.partialorder %v562, 1.0
        %vm761 = vcmp.eq.f32.partialorder %v563, 1.0
        %vm762 = vcmp.eq.f32.partialorder %v564, 1.0
        %vm763 = vcmp.eq.f32.partialorder %v565, 1.0
        %vm764 = vcmp.eq.f32.partialorder %v566, 1.0
        %vm765 = vcmp.eq.f32.partialorder %v567, 1.0
        %vm766 = vcmp.eq.f32.partialorder %v568, 1.0
        %vm767 = vcmp.eq.f32.partialorder %v569, 1.0
        %vm768 = vcmp.eq.f32.partialorder %v570, 1.0
        %vm769 = vcmp.eq.f32.partialorder %v571, 1.0
        %vm770 = vcmp.eq.f32.partialorder %v572, 1.0
        %vm771 = vcmp.eq.f32.partialorder %v573, 1.0
        %vm772 = vcmp.eq.f32.partialorder %v574, 1.0
        %vm773 = vcmp.eq.f32.partialorder %v575, 1.0
        %vm774 = vcmp.eq.f32.partialorder %v576, 1.0
        %vm775 = vcmp.eq.f32.partialorder %v577, 1.0
        %vm776 = vcmp.eq.f32.partialorder %v578, 1.0
        %vm777 = vcmp.eq.f32.partialorder %v579, 1.0
        %vm778 = vcmp.eq.f32.partialorder %v580, 1.0
        %vm779 = vcmp.eq.f32.partialorder %v581, 1.0
        %vm780 = vcmp.eq.f32.partialorder %v582, 1.0
        %vm781 = vcmp.eq.f32.partialorder %v583, 1.0
        %vm782 = vcmp.eq.f32.partialorder %v584, 1.0
        %vm783 = vcmp.eq.f32.partialorder %v585, 1.0
        %vm784 = vcmp.eq.f32.partialorder %v586, 1.0
        %vm785 = vcmp.eq.f32.partialorder %v587, 1.0
        %vm786 = vcmp.eq.f32.partialorder %v588, 1.0
        %vm787 = vcmp.eq.f32.partialorder %v589, 1.0
        %vm788 = vcmp.eq.f32.partialorder %v590, 1.0
        %vm789 = vcmp.eq.f32.partialorder %v591, 1.0
        %vm790 = vcmp.eq.f32.partialorder %v592, 1.0
        %vm791 = vcmp.eq.f32.partialorder %v593, 1.0
        %vm792 = vcmp.eq.f32.partialorder %v594, 1.0
        %vm793 = vcmp.eq.f32.partialorder %v595, 1.0
        %vm794 = vcmp.eq.f32.partialorder %v596, 1.0
        %vm795 = vcmp.eq.f32.partialorder %v597, 1.0
        %vm796 = vcmp.eq.f32.partialorder %v598, 1.0
        %s797 = scalar_lea.vmem [#allocation3], 1
        %v798 = vld [vmem:[%s797] ss:$8 sm:$0x3]
        %v800 = vperm.slane %v798, 0
        %v801 = vperm.slane %v798, 1
        %v804 = vsel %vm733, %v800, 0.0
        %v805 = vsel %vm734, %v801, 0.0
        %v806 = vsel %vm735, %v800, 0.0
        %v807 = vsel %vm736, %v801, 0.0
        %v808 = vsel %vm737, %v800, 0.0
        %v809 = vsel %vm738, %v801, 0.0
        %v810 = vsel %vm739, %v800, 0.0
        %v811 = vsel %vm740, %v801, 0.0
        %v812 = vsel %vm741, %v800, 0.0
        %v813 = vsel %vm742, %v801, 0.0
        %v814 = vsel %vm743, %v800, 0.0
        %v815 = vsel %vm744, %v801, 0.0
        %v816 = vsel %vm745, %v800, 0.0
        %v817 = vsel %vm746, %v801, 0.0
        %v818 = vsel %vm747, %v800, 0.0
        %v819 = vsel %vm748, %v801, 0.0
        %v820 = vsel %vm749, %v800, 0.0
        %v821 = vsel %vm750, %v801, 0.0
        %v822 = vsel %vm751, %v800, 0.0
        %v823 = vsel %vm752, %v801, 0.0
        %v824 = vsel %vm753, %v800, 0.0
        %v825 = vsel %vm754, %v801, 0.0
        %v826 = vsel %vm755, %v800, 0.0
        %v827 = vsel %vm756, %v801, 0.0
        %v828 = vsel %vm757, %v800, 0.0
        %v829 = vsel %vm758, %v801, 0.0
        %v830 = vsel %vm759, %v800, 0.0
        %v831 = vsel %vm760, %v801, 0.0
        %v832 = vsel %vm761, %v800, 0.0
        %v833 = vsel %vm762, %v801, 0.0
        %v834 = vsel %vm763, %v800, 0.0
        %v835 = vsel %vm764, %v801, 0.0
        %v836 = vsel %vm765, %v800, 0.0
        %v837 = vsel %vm766, %v801, 0.0
        %v838 = vsel %vm767, %v800, 0.0
        %v839 = vsel %vm768, %v801, 0.0
        %v840 = vsel %vm769, %v800, 0.0
        %v841 = vsel %vm770, %v801, 0.0
        %v842 = vsel %vm771, %v800, 0.0
        %v843 = vsel %vm772, %v801, 0.0
        %v844 = vsel %vm773, %v800, 0.0
        %v845 = vsel %vm774, %v801, 0.0
        %v846 = vsel %vm775, %v800, 0.0
        %v847 = vsel %vm776, %v801, 0.0
        %v848 = vsel %vm777, %v800, 0.0
        %v849 = vsel %vm778, %v801, 0.0
        %v850 = vsel %vm779, %v800, 0.0
        %v851 = vsel %vm780, %v801, 0.0
        %v852 = vsel %vm781, %v800, 0.0
        %v853 = vsel %vm782, %v801, 0.0
        %v854 = vsel %vm783, %v800, 0.0
        %v855 = vsel %vm784, %v801, 0.0
        %v856 = vsel %vm785, %v800, 0.0
        %v857 = vsel %vm786, %v801, 0.0
        %v858 = vsel %vm787, %v800, 0.0
        %v859 = vsel %vm788, %v801, 0.0
        %v860 = vsel %vm789, %v800, 0.0
        %v861 = vsel %vm790, %v801, 0.0
        %v862 = vsel %vm791, %v800, 0.0
        %v863 = vsel %vm792, %v801, 0.0
        %v864 = vsel %vm793, %v800, 0.0
        %v865 = vsel %vm794, %v801, 0.0
        %v866 = vsel %vm795, %v800, 0.0
        %v867 = vsel %vm796, %v801, 0.0
        %v868 = vadd.f32 %v669, %v804
        %v869 = vadd.f32 %v670, %v805
        %v870 = vadd.f32 %v671, %v806
        %v871 = vadd.f32 %v672, %v807
        %v872 = vadd.f32 %v673, %v808
        %v873 = vadd.f32 %v674, %v809
        %v874 = vadd.f32 %v675, %v810
        %v875 = vadd.f32 %v676, %v811
        %v876 = vadd.f32 %v677, %v812
        %v877 = vadd.f32 %v678, %v813
        %v878 = vadd.f32 %v679, %v814
        %v879 = vadd.f32 %v680, %v815
        %v880 = vadd.f32 %v681, %v816
        %v881 = vadd.f32 %v682, %v817
        %v882 = vadd.f32 %v683, %v818
        %v883 = vadd.f32 %v684, %v819
        %v884 = vadd.f32 %v685, %v820
        %v885 = vadd.f32 %v686, %v821
        %v886 = vadd.f32 %v687, %v822
        %v887 = vadd.f32 %v688, %v823
        %v888 = vadd.f32 %v689, %v824
        %v889 = vadd.f32 %v690, %v825
        %v890 = vadd.f32 %v691, %v826
        %v891 = vadd.f32 %v692, %v827
        %v892 = vadd.f32 %v693, %v828
        %v893 = vadd.f32 %v694, %v829
        %v894 = vadd.f32 %v695, %v830
        %v895 = vadd.f32 %v696, %v831
        %v896 = vadd.f32 %v697, %v832
        %v897 = vadd.f32 %v698, %v833
        %v898 = vadd.f32 %v699, %v834
        %v899 = vadd.f32 %v700, %v835
        %v900 = vadd.f32 %v701, %v836
        %v901 = vadd.f32 %v702, %v837
        %v902 = vadd.f32 %v703, %v838
        %v903 = vadd.f32 %v704, %v839
        %v904 = vadd.f32 %v705, %v840
        %v905 = vadd.f32 %v706, %v841
        %v906 = vadd.f32 %v707, %v842
        %v907 = vadd.f32 %v708, %v843
        %v908 = vadd.f32 %v709, %v844
        %v909 = vadd.f32 %v710, %v845
        %v910 = vadd.f32 %v711, %v846
        %v911 = vadd.f32 %v712, %v847
        %v912 = vadd.f32 %v713, %v848
        %v913 = vadd.f32 %v714, %v849
        %v914 = vadd.f32 %v715, %v850
        %v915 = vadd.f32 %v716, %v851
        %v916 = vadd.f32 %v717, %v852
        %v917 = vadd.f32 %v718, %v853
        %v918 = vadd.f32 %v719, %v854
        %v919 = vadd.f32 %v720, %v855
        %v920 = vadd.f32 %v721, %v856
        %v921 = vadd.f32 %v722, %v857
        %v922 = vadd.f32 %v723, %v858
        %v923 = vadd.f32 %v724, %v859
        %v924 = vadd.f32 %v725, %v860
        %v925 = vadd.f32 %v726, %v861
        %v926 = vadd.f32 %v727, %v862
        %v927 = vadd.f32 %v728, %v863
        %v928 = vadd.f32 %v729, %v864
        %v929 = vadd.f32 %v730, %v865
        %v930 = vadd.f32 %v731, %v866
        %v931 = vadd.f32 %v732, %v867
        %vm932 = vcmp.eq.f32.partialorder %v535, 16.0
        %vm933 = vcmp.eq.f32.partialorder %v536, 16.0
        %vm934 = vcmp.eq.f32.partialorder %v537, 16.0
        %vm935 = vcmp.eq.f32.partialorder %v538, 16.0
        %vm936 = vcmp.eq.f32.partialorder %v539, 16.0
        %vm937 = vcmp.eq.f32.partialorder %v540, 16.0
        %vm938 = vcmp.eq.f32.partialorder %v541, 16.0
        %vm939 = vcmp.eq.f32.partialorder %v542, 16.0
        %vm940 = vcmp.eq.f32.partialorder %v543, 16.0
        %vm941 = vcmp.eq.f32.partialorder %v544, 16.0
        %vm942 = vcmp.eq.f32.partialorder %v545, 16.0
        %vm943 = vcmp.eq.f32.partialorder %v546, 16.0
        %vm944 = vcmp.eq.f32.partialorder %v547, 16.0
        %vm945 = vcmp.eq.f32.partialorder %v548, 16.0
        %vm946 = vcmp.eq.f32.partialorder %v549, 16.0
        %vm947 = vcmp.eq.f32.partialorder %v550, 16.0
        %vm948 = vcmp.eq.f32.partialorder %v551, 16.0
        %vm949 = vcmp.eq.f32.partialorder %v552, 16.0
        %vm950 = vcmp.eq.f32.partialorder %v553, 16.0
        %vm951 = vcmp.eq.f32.partialorder %v554, 16.0
        %vm952 = vcmp.eq.f32.partialorder %v555, 16.0
        %vm953 = vcmp.eq.f32.partialorder %v556, 16.0
        %vm954 = vcmp.eq.f32.partialorder %v557, 16.0
        %vm955 = vcmp.eq.f32.partialorder %v558, 16.0
        %vm956 = vcmp.eq.f32.partialorder %v559, 16.0
        %vm957 = vcmp.eq.f32.partialorder %v560, 16.0
        %vm958 = vcmp.eq.f32.partialorder %v561, 16.0
        %vm959 = vcmp.eq.f32.partialorder %v562, 16.0
        %vm960 = vcmp.eq.f32.partialorder %v563, 16.0
        %vm961 = vcmp.eq.f32.partialorder %v564, 16.0
        %vm962 = vcmp.eq.f32.partialorder %v565, 16.0
        %vm963 = vcmp.eq.f32.partialorder %v566, 16.0
        %vm964 = vcmp.eq.f32.partialorder %v567, 16.0
        %vm965 = vcmp.eq.f32.partialorder %v568, 16.0
        %vm966 = vcmp.eq.f32.partialorder %v569, 16.0
        %vm967 = vcmp.eq.f32.partialorder %v570, 16.0
        %vm968 = vcmp.eq.f32.partialorder %v571, 16.0
        %vm969 = vcmp.eq.f32.partialorder %v572, 16.0
        %vm970 = vcmp.eq.f32.partialorder %v573, 16.0
        %vm971 = vcmp.eq.f32.partialorder %v574, 16.0
        %vm972 = vcmp.eq.f32.partialorder %v575, 16.0
        %vm973 = vcmp.eq.f32.partialorder %v576, 16.0
        %vm974 = vcmp.eq.f32.partialorder %v577, 16.0
        %vm975 = vcmp.eq.f32.partialorder %v578, 16.0
        %vm976 = vcmp.eq.f32.partialorder %v579, 16.0
        %vm977 = vcmp.eq.f32.partialorder %v580, 16.0
        %vm978 = vcmp.eq.f32.partialorder %v581, 16.0
        %vm979 = vcmp.eq.f32.partialorder %v582, 16.0
        %vm980 = vcmp.eq.f32.partialorder %v583, 16.0
        %vm981 = vcmp.eq.f32.partialorder %v584, 16.0
        %vm982 = vcmp.eq.f32.partialorder %v585, 16.0
        %vm983 = vcmp.eq.f32.partialorder %v586, 16.0
        %vm984 = vcmp.eq.f32.partialorder %v587, 16.0
        %vm985 = vcmp.eq.f32.partialorder %v588, 16.0
        %vm986 = vcmp.eq.f32.partialorder %v589, 16.0
        %vm987 = vcmp.eq.f32.partialorder %v590, 16.0
        %vm988 = vcmp.eq.f32.partialorder %v591, 16.0
        %vm989 = vcmp.eq.f32.partialorder %v592, 16.0
        %vm990 = vcmp.eq.f32.partialorder %v593, 16.0
        %vm991 = vcmp.eq.f32.partialorder %v594, 16.0
        %vm992 = vcmp.eq.f32.partialorder %v595, 16.0
        %vm993 = vcmp.eq.f32.partialorder %v596, 16.0
        %vm994 = vcmp.eq.f32.partialorder %v597, 16.0
        %vm995 = vcmp.eq.f32.partialorder %v598, 16.0
        %s996 = scalar_lea.vmem [#allocation3], 2
        %v997 = vld [vmem:[%s996] ss:$8 sm:$0x3]
        %v999 = vperm.slane %v997, 0
        %v1000 = vperm.slane %v997, 1
        %v1003 = vsel %vm932, %v999, 0.0
        %v1004 = vsel %vm933, %v1000, 0.0
        %v1005 = vsel %vm934, %v999, 0.0
        %v1006 = vsel %vm935, %v1000, 0.0
        %v1007 = vsel %vm936, %v999, 0.0
        %v1008 = vsel %vm937, %v1000, 0.0
        %v1009 = vsel %vm938, %v999, 0.0
        %v1010 = vsel %vm939, %v1000, 0.0
        %v1011 = vsel %vm940, %v999, 0.0
        %v1012 = vsel %vm941, %v1000, 0.0
        %v1013 = vsel %vm942, %v999, 0.0
        %v1014 = vsel %vm943, %v1000, 0.0
        %v1015 = vsel %vm944, %v999, 0.0
        %v1016 = vsel %vm945, %v1000, 0.0
        %v1017 = vsel %vm946, %v999, 0.0
        %v1018 = vsel %vm947, %v1000, 0.0
        %v1019 = vsel %vm948, %v999, 0.0
        %v1020 = vsel %vm949, %v1000, 0.0
        %v1021 = vsel %vm950, %v999, 0.0
        %v1022 = vsel %vm951, %v1000, 0.0
        %v1023 = vsel %vm952, %v999, 0.0
        %v1024 = vsel %vm953, %v1000, 0.0
        %v1025 = vsel %vm954, %v999, 0.0
        %v1026 = vsel %vm955, %v1000, 0.0
        %v1027 = vsel %vm956, %v999, 0.0
        %v1028 = vsel %vm957, %v1000, 0.0
        %v1029 = vsel %vm958, %v999, 0.0
        %v1030 = vsel %vm959, %v1000, 0.0
        %v1031 = vsel %vm960, %v999, 0.0
        %v1032 = vsel %vm961, %v1000, 0.0
        %v1033 = vsel %vm962, %v999, 0.0
        %v1034 = vsel %vm963, %v1000, 0.0
        %v1035 = vsel %vm964, %v999, 0.0
        %v1036 = vsel %vm965, %v1000, 0.0
        %v1037 = vsel %vm966, %v999, 0.0
        %v1038 = vsel %vm967, %v1000, 0.0
        %v1039 = vsel %vm968, %v999, 0.0
        %v1040 = vsel %vm969, %v1000, 0.0
        %v1041 = vsel %vm970, %v999, 0.0
        %v1042 = vsel %vm971, %v1000, 0.0
        %v1043 = vsel %vm972, %v999, 0.0
        %v1044 = vsel %vm973, %v1000, 0.0
        %v1045 = vsel %vm974, %v999, 0.0
        %v1046 = vsel %vm975, %v1000, 0.0
        %v1047 = vsel %vm976, %v999, 0.0
        %v1048 = vsel %vm977, %v1000, 0.0
        %v1049 = vsel %vm978, %v999, 0.0
        %v1050 = vsel %vm979, %v1000, 0.0
        %v1051 = vsel %vm980, %v999, 0.0
        %v1052 = vsel %vm981, %v1000, 0.0
        %v1053 = vsel %vm982, %v999, 0.0
        %v1054 = vsel %vm983, %v1000, 0.0
        %v1055 = vsel %vm984, %v999, 0.0
        %v1056 = vsel %vm985, %v1000, 0.0
        %v1057 = vsel %vm986, %v999, 0.0
        %v1058 = vsel %vm987, %v1000, 0.0
        %v1059 = vsel %vm988, %v999, 0.0
        %v1060 = vsel %vm989, %v1000, 0.0
        %v1061 = vsel %vm990, %v999, 0.0
        %v1062 = vsel %vm991, %v1000, 0.0
        %v1063 = vsel %vm992, %v999, 0.0
        %v1064 = vsel %vm993, %v1000, 0.0
        %v1065 = vsel %vm994, %v999, 0.0
        %v1066 = vsel %vm995, %v1000, 0.0
        %v1067 = vadd.f32 %v868, %v1003
        %v1068 = vadd.f32 %v869, %v1004
        %v1069 = vadd.f32 %v870, %v1005
        %v1070 = vadd.f32 %v871, %v1006
        %v1071 = vadd.f32 %v872, %v1007
        %v1072 = vadd.f32 %v873, %v1008
        %v1073 = vadd.f32 %v874, %v1009
        %v1074 = vadd.f32 %v875, %v1010
        %v1075 = vadd.f32 %v876, %v1011
        %v1076 = vadd.f32 %v877, %v1012
        %v1077 = vadd.f32 %v878, %v1013
        %v1078 = vadd.f32 %v879, %v1014
        %v1079 = vadd.f32 %v880, %v1015
        %v1080 = vadd.f32 %v881, %v1016
        %v1081 = vadd.f32 %v882, %v1017
        %v1082 = vadd.f32 %v883, %v1018
        %v1083 = vadd.f32 %v884, %v1019
        %v1084 = vadd.f32 %v885, %v1020
        %v1085 = vadd.f32 %v886, %v1021
        %v1086 = vadd.f32 %v887, %v1022
        %v1087 = vadd.f32 %v888, %v1023
        %v1088 = vadd.f32 %v889, %v1024
        %v1089 = vadd.f32 %v890, %v1025
        %v1090 = vadd.f32 %v891, %v1026
        %v1091 = vadd.f32 %v892, %v1027
        %v1092 = vadd.f32 %v893, %v1028
        %v1093 = vadd.f32 %v894, %v1029
        %v1094 = vadd.f32 %v895, %v1030
        %v1095 = vadd.f32 %v896, %v1031
        %v1096 = vadd.f32 %v897, %v1032
        %v1097 = vadd.f32 %v898, %v1033
        %v1098 = vadd.f32 %v899, %v1034
        %v1099 = vadd.f32 %v900, %v1035
        %v1100 = vadd.f32 %v901, %v1036
        %v1101 = vadd.f32 %v902, %v1037
        %v1102 = vadd.f32 %v903, %v1038
        %v1103 = vadd.f32 %v904, %v1039
        %v1104 = vadd.f32 %v905, %v1040
        %v1105 = vadd.f32 %v906, %v1041
        %v1106 = vadd.f32 %v907, %v1042
        %v1107 = vadd.f32 %v908, %v1043
        %v1108 = vadd.f32 %v909, %v1044
        %v1109 = vadd.f32 %v910, %v1045
        %v1110 = vadd.f32 %v911, %v1046
        %v1111 = vadd.f32 %v912, %v1047
        %v1112 = vadd.f32 %v913, %v1048
        %v1113 = vadd.f32 %v914, %v1049
        %v1114 = vadd.f32 %v915, %v1050
        %v1115 = vadd.f32 %v916, %v1051
        %v1116 = vadd.f32 %v917, %v1052
        %v1117 = vadd.f32 %v918, %v1053
        %v1118 = vadd.f32 %v919, %v1054
        %v1119 = vadd.f32 %v920, %v1055
        %v1120 = vadd.f32 %v921, %v1056
        %v1121 = vadd.f32 %v922, %v1057
        %v1122 = vadd.f32 %v923, %v1058
        %v1123 = vadd.f32 %v924, %v1059
        %v1124 = vadd.f32 %v925, %v1060
        %v1125 = vadd.f32 %v926, %v1061
        %v1126 = vadd.f32 %v927, %v1062
        %v1127 = vadd.f32 %v928, %v1063
        %v1128 = vadd.f32 %v929, %v1064
        %v1129 = vadd.f32 %v930, %v1065
        %v1130 = vadd.f32 %v931, %v1066
        %vm1131 = vcmp.eq.f32.partialorder %v535, 17.0
        %vm1132 = vcmp.eq.f32.partialorder %v536, 17.0
        %vm1133 = vcmp.eq.f32.partialorder %v537, 17.0
        %vm1134 = vcmp.eq.f32.partialorder %v538, 17.0
        %vm1135 = vcmp.eq.f32.partialorder %v539, 17.0
        %vm1136 = vcmp.eq.f32.partialorder %v540, 17.0
        %vm1137 = vcmp.eq.f32.partialorder %v541, 17.0
        %vm1138 = vcmp.eq.f32.partialorder %v542, 17.0
        %vm1139 = vcmp.eq.f32.partialorder %v543, 17.0
        %vm1140 = vcmp.eq.f32.partialorder %v544, 17.0
        %vm1141 = vcmp.eq.f32.partialorder %v545, 17.0
        %vm1142 = vcmp.eq.f32.partialorder %v546, 17.0
        %vm1143 = vcmp.eq.f32.partialorder %v547, 17.0
        %vm1144 = vcmp.eq.f32.partialorder %v548, 17.0
        %vm1145 = vcmp.eq.f32.partialorder %v549, 17.0
        %vm1146 = vcmp.eq.f32.partialorder %v550, 17.0
        %vm1147 = vcmp.eq.f32.partialorder %v551, 17.0
        %vm1148 = vcmp.eq.f32.partialorder %v552, 17.0
        %vm1149 = vcmp.eq.f32.partialorder %v553, 17.0
        %vm1150 = vcmp.eq.f32.partialorder %v554, 17.0
        %vm1151 = vcmp.eq.f32.partialorder %v555, 17.0
        %vm1152 = vcmp.eq.f32.partialorder %v556, 17.0
        %vm1153 = vcmp.eq.f32.partialorder %v557, 17.0
        %vm1154 = vcmp.eq.f32.partialorder %v558, 17.0
        %vm1155 = vcmp.eq.f32.partialorder %v559, 17.0
        %vm1156 = vcmp.eq.f32.partialorder %v560, 17.0
        %vm1157 = vcmp.eq.f32.partialorder %v561, 17.0
        %vm1158 = vcmp.eq.f32.partialorder %v562, 17.0
        %vm1159 = vcmp.eq.f32.partialorder %v563, 17.0
        %vm1160 = vcmp.eq.f32.partialorder %v564, 17.0
        %vm1161 = vcmp.eq.f32.partialorder %v565, 17.0
        %vm1162 = vcmp.eq.f32.partialorder %v566, 17.0
        %vm1163 = vcmp.eq.f32.partialorder %v567, 17.0
        %vm1164 = vcmp.eq.f32.partialorder %v568, 17.0
        %vm1165 = vcmp.eq.f32.partialorder %v569, 17.0
        %vm1166 = vcmp.eq.f32.partialorder %v570, 17.0
        %vm1167 = vcmp.eq.f32.partialorder %v571, 17.0
        %vm1168 = vcmp.eq.f32.partialorder %v572, 17.0
        %vm1169 = vcmp.eq.f32.partialorder %v573, 17.0
        %vm1170 = vcmp.eq.f32.partialorder %v574, 17.0
        %vm1171 = vcmp.eq.f32.partialorder %v575, 17.0
        %vm1172 = vcmp.eq.f32.partialorder %v576, 17.0
        %vm1173 = vcmp.eq.f32.partialorder %v577, 17.0
        %vm1174 = vcmp.eq.f32.partialorder %v578, 17.0
        %vm1175 = vcmp.eq.f32.partialorder %v579, 17.0
        %vm1176 = vcmp.eq.f32.partialorder %v580, 17.0
        %vm1177 = vcmp.eq.f32.partialorder %v581, 17.0
        %vm1178 = vcmp.eq.f32.partialorder %v582, 17.0
        %vm1179 = vcmp.eq.f32.partialorder %v583, 17.0
        %vm1180 = vcmp.eq.f32.partialorder %v584, 17.0
        %vm1181 = vcmp.eq.f32.partialorder %v585, 17.0
        %vm1182 = vcmp.eq.f32.partialorder %v586, 17.0
        %vm1183 = vcmp.eq.f32.partialorder %v587, 17.0
        %vm1184 = vcmp.eq.f32.partialorder %v588, 17.0
        %vm1185 = vcmp.eq.f32.partialorder %v589, 17.0
        %vm1186 = vcmp.eq.f32.partialorder %v590, 17.0
        %vm1187 = vcmp.eq.f32.partialorder %v591, 17.0
        %vm1188 = vcmp.eq.f32.partialorder %v592, 17.0
        %vm1189 = vcmp.eq.f32.partialorder %v593, 17.0
        %vm1190 = vcmp.eq.f32.partialorder %v594, 17.0
        %vm1191 = vcmp.eq.f32.partialorder %v595, 17.0
        %vm1192 = vcmp.eq.f32.partialorder %v596, 17.0
        %vm1193 = vcmp.eq.f32.partialorder %v597, 17.0
        %vm1194 = vcmp.eq.f32.partialorder %v598, 17.0
        %s1195 = scalar_lea.vmem [#allocation3], 3
        %v1196 = vld [vmem:[%s1195] ss:$8 sm:$0x3]
        %v1198 = vperm.slane %v1196, 0
        %v1199 = vperm.slane %v1196, 1
        %v1202 = vsel %vm1131, %v1198, 0.0
        %v1203 = vsel %vm1132, %v1199, 0.0
        %v1204 = vsel %vm1133, %v1198, 0.0
        %v1205 = vsel %vm1134, %v1199, 0.0
        %v1206 = vsel %vm1135, %v1198, 0.0
        %v1207 = vsel %vm1136, %v1199, 0.0
        %v1208 = vsel %vm1137, %v1198, 0.0
        %v1209 = vsel %vm1138, %v1199, 0.0
        %v1210 = vsel %vm1139, %v1198, 0.0
        %v1211 = vsel %vm1140, %v1199, 0.0
        %v1212 = vsel %vm1141, %v1198, 0.0
        %v1213 = vsel %vm1142, %v1199, 0.0
        %v1214 = vsel %vm1143, %v1198, 0.0
        %v1215 = vsel %vm1144, %v1199, 0.0
        %v1216 = vsel %vm1145, %v1198, 0.0
        %v1217 = vsel %vm1146, %v1199, 0.0
        %v1218 = vsel %vm1147, %v1198, 0.0
        %v1219 = vsel %vm1148, %v1199, 0.0
        %v1220 = vsel %vm1149, %v1198, 0.0
        %v1221 = vsel %vm1150, %v1199, 0.0
        %v1222 = vsel %vm1151, %v1198, 0.0
        %v1223 = vsel %vm1152, %v1199, 0.0
        %v1224 = vsel %vm1153, %v1198, 0.0
        %v1225 = vsel %vm1154, %v1199, 0.0
        %v1226 = vsel %vm1155, %v1198, 0.0
        %v1227 = vsel %vm1156, %v1199, 0.0
        %v1228 = vsel %vm1157, %v1198, 0.0
        %v1229 = vsel %vm1158, %v1199, 0.0
        %v1230 = vsel %vm1159, %v1198, 0.0
        %v1231 = vsel %vm1160, %v1199, 0.0
        %v1232 = vsel %vm1161, %v1198, 0.0
        %v1233 = vsel %vm1162, %v1199, 0.0
        %v1234 = vsel %vm1163, %v1198, 0.0
        %v1235 = vsel %vm1164, %v1199, 0.0
        %v1236 = vsel %vm1165, %v1198, 0.0
        %v1237 = vsel %vm1166, %v1199, 0.0
        %v1238 = vsel %vm1167, %v1198, 0.0
        %v1239 = vsel %vm1168, %v1199, 0.0
        %v1240 = vsel %vm1169, %v1198, 0.0
        %v1241 = vsel %vm1170, %v1199, 0.0
        %v1242 = vsel %vm1171, %v1198, 0.0
        %v1243 = vsel %vm1172, %v1199, 0.0
        %v1244 = vsel %vm1173, %v1198, 0.0
        %v1245 = vsel %vm1174, %v1199, 0.0
        %v1246 = vsel %vm1175, %v1198, 0.0
        %v1247 = vsel %vm1176, %v1199, 0.0
        %v1248 = vsel %vm1177, %v1198, 0.0
        %v1249 = vsel %vm1178, %v1199, 0.0
        %v1250 = vsel %vm1179, %v1198, 0.0
        %v1251 = vsel %vm1180, %v1199, 0.0
        %v1252 = vsel %vm1181, %v1198, 0.0
        %v1253 = vsel %vm1182, %v1199, 0.0
        %v1254 = vsel %vm1183, %v1198, 0.0
        %v1255 = vsel %vm1184, %v1199, 0.0
        %v1256 = vsel %vm1185, %v1198, 0.0
        %v1257 = vsel %vm1186, %v1199, 0.0
        %v1258 = vsel %vm1187, %v1198, 0.0
        %v1259 = vsel %vm1188, %v1199, 0.0
        %v1260 = vsel %vm1189, %v1198, 0.0
        %v1261 = vsel %vm1190, %v1199, 0.0
        %v1262 = vsel %vm1191, %v1198, 0.0
        %v1263 = vsel %vm1192, %v1199, 0.0
        %v1264 = vsel %vm1193, %v1198, 0.0
        %v1265 = vsel %vm1194, %v1199, 0.0
        %v1266 = vadd.f32 %v1067, %v1202
        %v1267 = vadd.f32 %v1068, %v1203
        %v1268 = vadd.f32 %v1069, %v1204
        %v1269 = vadd.f32 %v1070, %v1205
        %v1270 = vadd.f32 %v1071, %v1206
        %v1271 = vadd.f32 %v1072, %v1207
        %v1272 = vadd.f32 %v1073, %v1208
        %v1273 = vadd.f32 %v1074, %v1209
        %v1274 = vadd.f32 %v1075, %v1210
        %v1275 = vadd.f32 %v1076, %v1211
        %v1276 = vadd.f32 %v1077, %v1212
        %v1277 = vadd.f32 %v1078, %v1213
        %v1278 = vadd.f32 %v1079, %v1214
        %v1279 = vadd.f32 %v1080, %v1215
        %v1280 = vadd.f32 %v1081, %v1216
        %v1281 = vadd.f32 %v1082, %v1217
        %v1282 = vadd.f32 %v1083, %v1218
        %v1283 = vadd.f32 %v1084, %v1219
        %v1284 = vadd.f32 %v1085, %v1220
        %v1285 = vadd.f32 %v1086, %v1221
        %v1286 = vadd.f32 %v1087, %v1222
        %v1287 = vadd.f32 %v1088, %v1223
        %v1288 = vadd.f32 %v1089, %v1224
        %v1289 = vadd.f32 %v1090, %v1225
        %v1290 = vadd.f32 %v1091, %v1226
        %v1291 = vadd.f32 %v1092, %v1227
        %v1292 = vadd.f32 %v1093, %v1228
        %v1293 = vadd.f32 %v1094, %v1229
        %v1294 = vadd.f32 %v1095, %v1230
        %v1295 = vadd.f32 %v1096, %v1231
        %v1296 = vadd.f32 %v1097, %v1232
        %v1297 = vadd.f32 %v1098, %v1233
        %v1298 = vadd.f32 %v1099, %v1234
        %v1299 = vadd.f32 %v1100, %v1235
        %v1300 = vadd.f32 %v1101, %v1236
        %v1301 = vadd.f32 %v1102, %v1237
        %v1302 = vadd.f32 %v1103, %v1238
        %v1303 = vadd.f32 %v1104, %v1239
        %v1304 = vadd.f32 %v1105, %v1240
        %v1305 = vadd.f32 %v1106, %v1241
        %v1306 = vadd.f32 %v1107, %v1242
        %v1307 = vadd.f32 %v1108, %v1243
        %v1308 = vadd.f32 %v1109, %v1244
        %v1309 = vadd.f32 %v1110, %v1245
        %v1310 = vadd.f32 %v1111, %v1246
        %v1311 = vadd.f32 %v1112, %v1247
        %v1312 = vadd.f32 %v1113, %v1248
        %v1313 = vadd.f32 %v1114, %v1249
        %v1314 = vadd.f32 %v1115, %v1250
        %v1315 = vadd.f32 %v1116, %v1251
        %v1316 = vadd.f32 %v1117, %v1252
        %v1317 = vadd.f32 %v1118, %v1253
        %v1318 = vadd.f32 %v1119, %v1254
        %v1319 = vadd.f32 %v1120, %v1255
        %v1320 = vadd.f32 %v1121, %v1256
        %v1321 = vadd.f32 %v1122, %v1257
        %v1322 = vadd.f32 %v1123, %v1258
        %v1323 = vadd.f32 %v1124, %v1259
        %v1324 = vadd.f32 %v1125, %v1260
        %v1325 = vadd.f32 %v1126, %v1261
        %v1326 = vadd.f32 %v1127, %v1262
        %v1327 = vadd.f32 %v1128, %v1263
        %v1328 = vadd.f32 %v1129, %v1264
        %v1329 = vadd.f32 %v1130, %v1265
        %v1330 = vld [vmem:[#allocation2] sm:$0xff]
        %v1331 = vld [vmem:[%s227] sm:$0xff]
        %1333 = vst [vmem:[#allocation1] ss:$2 sm:$0xff] %v1331
        %v1334 = vld.sshfl [vmem:[#allocation1] sm:$0xff pattern:$0x75316420]
        %v1335 = vld.sshfl [vmem:[#allocation1 + $0x8] sm:$0xff pattern:$0x75316420]
        %1338 = vmatpush.msra.mxu0 %v1296
        %1339 = vmatpush.msra.mxu0 %v1294
        %1340 = vmatpush.msra.mxu0 %v1292
        %1341 = vmatpush.msra.mxu0 %v1290
        %1342 = vmatpush.msra.mxu0 %v1288
        %1343 = vmatpush.msra.mxu0 %v1286
        %1344 = vmatpush.msra.mxu0 %v1284
        %1345 = vmatpush.msra.mxu0 %v1282
        %1346 = vmatpush.msra.mxu0 %v1280
        %1347 = vmatpush.msra.mxu0 %v1278
        %1348 = vmatpush.msra.mxu0 %v1276
        %1349 = vmatpush.msra.mxu0 %v1274
        %1350 = vmatpush.msra.mxu0 %v1272
        %1351 = vmatpush.msra.mxu0 %v1270
        %1352 = vmatpush.msra.mxu0 %v1268
        %1353 = vmatpush.msra.mxu0 %v1266
        %1354 = vmatmul.f32.gmra.mxu0 %v1334
        %v1355 = vpop.f32.mrf.mxu0
        %v1356 = vadd.f32 0.0, %v1355
        %1357 = vdwg.mxu0
        %1358 = vmatpush.msra.mxu0 %v1328
        %1359 = vmatpush.msra.mxu0 %v1326
        %1360 = vmatpush.msra.mxu0 %v1324
        %1361 = vmatpush.msra.mxu0 %v1322
        %1362 = vmatpush.msra.mxu0 %v1320
        %1363 = vmatpush.msra.mxu0 %v1318
        %1364 = vmatpush.msra.mxu0 %v1316
        %1365 = vmatpush.msra.mxu0 %v1314
        %1366 = vmatpush.msra.mxu0 %v1312
        %1367 = vmatpush.msra.mxu0 %v1310
        %1368 = vmatpush.msra.mxu0 %v1308
        %1369 = vmatpush.msra.mxu0 %v1306
        %1370 = vmatpush.msra.mxu0 %v1304
        %1371 = vmatpush.msra.mxu0 %v1302
        %1372 = vmatpush.msra.mxu0 %v1300
        %1373 = vmatpush.msra.mxu0 %v1298
        %1374 = vmatmul.f32.gmra.mxu0 %v1335
        %v1375 = vpop.f32.mrf.mxu0
        %v1376 = vadd.f32 %v1356, %v1375
        %1377 = vdwg.mxu0
        %1378 = vmatpush.msra.mxu0 %v1297
        %1379 = vmatpush.msra.mxu0 %v1295
        %1380 = vmatpush.msra.mxu0 %v1293
        %1381 = vmatpush.msra.mxu0 %v1291
        %1382 = vmatpush.msra.mxu0 %v1289
        %1383 = vmatpush.msra.mxu0 %v1287
        %1384 = vmatpush.msra.mxu0 %v1285
        %1385 = vmatpush.msra.mxu0 %v1283
        %1386 = vmatpush.msra.mxu0 %v1281
        %1387 = vmatpush.msra.mxu0 %v1279
        %1388 = vmatpush.msra.mxu0 %v1277
        %1389 = vmatpush.msra.mxu0 %v1275
        %1390 = vmatpush.msra.mxu0 %v1273
        %1391 = vmatpush.msra.mxu0 %v1271
        %1392 = vmatpush.msra.mxu0 %v1269
        %1393 = vmatpush.msra.mxu0 %v1267
        %1394 = vmatmul.f32.gmra.mxu0 %v1334
        %v1395 = vpop.f32.mrf.mxu0
        %v1396 = vadd.f32 0.0, %v1395
        %1397 = vdwg.mxu0
        %1398 = vmatpush.msra.mxu0 %v1329
        %1399 = vmatpush.msra.mxu0 %v1327
        %1400 = vmatpush.msra.mxu0 %v1325
        %1401 = vmatpush.msra.mxu0 %v1323
        %1402 = vmatpush.msra.mxu0 %v1321
        %1403 = vmatpush.msra.mxu0 %v1319
        %1404 = vmatpush.msra.mxu0 %v1317
        %1405 = vmatpush.msra.mxu0 %v1315
        %1406 = vmatpush.msra.mxu0 %v1313
        %1407 = vmatpush.msra.mxu0 %v1311
        %1408 = vmatpush.msra.mxu0 %v1309
        %1409 = vmatpush.msra.mxu0 %v1307
        %1410 = vmatpush.msra.mxu0 %v1305
        %1411 = vmatpush.msra.mxu0 %v1303
        %1412 = vmatpush.msra.mxu0 %v1301
        %1413 = vmatpush.msra.mxu0 %v1299
        %1414 = vmatmul.f32.gmra.mxu0 %v1335
        %v1415 = vpop.f32.mrf.mxu0
        %v1416 = vadd.f32 %v1396, %v1415
        %1417 = vdwg.mxu0
        %v1420 = vrot.slane %v1416, 4
        %vm1421 = vcmask 1043456
        %v1422 = vsel %vm1421, %v1376, %v1420
        %v1424 = vadd.f32 %v1330, %v1422
        %1425 = vst [vmem:[#allocation2] sm:$0xff] %v1424
        // Predicated region
        $region41: #{tpu_custom_call.1} parent=27 // pred_check
          %p1426 = pneg %p275
        $region42: #{tpu_custom_call.1} parent=27 // pred_check_branch
          %1428 = sbr.rel (%p1426) target = $region44
        $region43: #{tpu_custom_call.1} parent=27 // pred_region
          %s1429 = scalar_lea.vmem [#allocation3], 5
          %v1430 = vld [vmem:[%s1429] ss:$8 sm:$0x3]
          %v1431 = vld [vmem:[#allocation2] sm:$0xff]
          %v1433 = vperm.slane %v1430, 0
          %v1434 = vperm.slane %v1430, 1
          %v1435 = vrot.slane %v1434, 4
          %v1436 = vsel %vm1421, %v1433, %v1435
          %v1438 = vmul.f32 %v1431, %v1436
          %1439 = vst [vmem:[%s263] sm:$0xff] %v1438
          %v1440 = vlaneseq
          %vm1441 = vcmp.ge.s32.totalorder %v1440, 0
          %vm1442 = vcmp.lt.s32.totalorder %v1440, 256
          %vm1443 = vmand %vm1441, %vm1442
          %1444 = vst.msk [vmem:[%s270] sm:$0x3] %vm1443, %v1430
        $region44: #{tpu_custom_call.1} parent=27 // pred_fallthru
          _
        %s1445 = sand.u32 %s112, 1
        %s1446 = scalar_lea.sflag [#allocation6], %s1445
        %s1447 = sand.u32 %s112, 1
        %s1448 = smul.addr %s1447, 8
        %s1449 = scalar_lea.vmem [#allocation9], %s1448
        %s1450 = sand.u32 %s140, 1
        %s1451 = scalar_lea.sflag [#allocation11], %s1450
        %s1452 = sand.u32 %s140, 1
        %s1453 = smul.addr %s1452, 2
        %s1454 = scalar_lea.vmem [#allocation10], %s1453
        // Predicated region
        $region45: #{tpu_custom_call.1} parent=27 // pred_check
          %p1455 = pneg %p122
        $region46: #{tpu_custom_call.1} parent=27 // pred_check_branch
          %1457 = sbr.rel (%p1455) target = $region48
        $region47: #{tpu_custom_call.1} parent=27 // pred_region
          %s1458 = smul.u32 2, %s33
          %1460 = vsyncadd %s1446, 0
          %s1461 = smul.addr %s32, 2
          %s1462 = sadd.s32 %s1458, %s1461
          %s1463 = smul.addr %s1462, 4
          %s1464 = scalar_lea.hbm %s2, %s1463
          %s1466 = sshll.u32 %s1449, 4
          %s1467 = int_to_ptr.vmem [resolvable:$true] %s1466
          %s1468 = sshll.u32 %s1464, 4
          %s1469 = int_to_ptr.hbm [resolvable:$true] %s1468
          %1471 = dma.vmem_to_hbm [thread:$0]  %s1467, 128, %s1469, %s1446
        $region48: #{tpu_custom_call.1} parent=27 // pred_fallthru
          _
        // Predicated region
        $region49: #{tpu_custom_call.1} parent=27 // pred_check
          %p1472 = pneg %p150
        $region50: #{tpu_custom_call.1} parent=27 // pred_check_branch
          %1474 = sbr.rel (%p1472) target = $region52
        $region51: #{tpu_custom_call.1} parent=27 // pred_region
          %s1475 = smul.u32 2, %s33
          %1477 = vsyncadd %s1451, 0
          %s1478 = smul.addr %s32, 2
          %s1479 = sadd.s32 %s1475, %s1478
          %s1480 = scalar_lea.hbm %s3, %s1479
          %s1482 = sshll.u32 %s1454, 4
          %s1483 = int_to_ptr.vmem [resolvable:$true] %s1482
          %s1484 = sshll.u32 %s1480, 4
          %s1485 = int_to_ptr.hbm [resolvable:$true] %s1484
          %1487 = dma.vmem_to_hbm [thread:$0]  %s1483, 32, %s1485, %s1451
        $region52: #{tpu_custom_call.1} parent=27 // pred_fallthru
          _
      $region28: #{tpu_custom_call.1} parent=5 // pred_fallthru
        _
      %p1488 = scmp.le.s32.totalorder 2, %s22
      // Predicated region
      $region53: #{tpu_custom_call.1} parent=5 // pred_check
        %p1489 = pneg %p1488
      $region54: #{tpu_custom_call.1} parent=5 // pred_check_branch
        %1491 = sbr.rel (%p1489) target = $region56
      $region55: #{tpu_custom_call.1} parent=5 // pred_region
        %s1492 = ssub.s32 %s22, 2
        // Predicated region
        $region57: #{tpu_custom_call.1} parent=55 // pred_check
          %p1493 = pneg %p128
        $region58: #{tpu_custom_call.1} parent=55 // pred_check_branch
          %1495 = sbr.rel (%p1493) target = $region60
        $region59: #{tpu_custom_call.1} parent=55 // pred_region
          %s1496 = sand.u32 %s113, 1
          %s1497 = scalar_lea.sflag [#allocation6], %s1496
          %s1498 = sand.u32 %s113, 1
          %s1499 = smul.addr %s1498, 8
          %s1500 = scalar_lea.vmem [#allocation9], %s1499
          %1502 = dma.done %s1497, 128
        $region60: #{tpu_custom_call.1} parent=55 // pred_fallthru
          _
        // Predicated region
        $region61: #{tpu_custom_call.1} parent=55 // pred_check
          %p1503 = pneg %p156
        $region62: #{tpu_custom_call.1} parent=55 // pred_check_branch
          %1505 = sbr.rel (%p1503) target = $region64
        $region63: #{tpu_custom_call.1} parent=55 // pred_region
          %s1506 = sand.u32 %s141, 1
          %s1507 = scalar_lea.sflag [#allocation11], %s1506
          %s1508 = sand.u32 %s141, 1
          %s1509 = smul.addr %s1508, 2
          %s1510 = scalar_lea.vmem [#allocation10], %s1509
          %1512 = dma.done %s1507, 32
        $region64: #{tpu_custom_call.1} parent=55 // pred_fallthru
          _
      $region56: #{tpu_custom_call.1} parent=5 // pred_fallthru
        _
    $region6: #{tpu_custom_call.1} parent=1 // loop_footer
      %s26 = sadd.s32 1, %s22
    $region7: #{tpu_custom_call.1} parent=1 // loop_footer_branch
      %21 = sbr.rel target = $region3
    $region8: #{tpu_custom_call.1} parent=1 // loop_exit
      _
    %1513 = vsyncpa [#allocation5], 1
    %s1514 = scalar_lea.sflag [#allocation5], 1
    %1515 = vsyncpa %s1514, 1
    %1516 = vsyncpa [#allocation8], 1
    %s1517 = scalar_lea.sflag [#allocation8], 1
    %1518 = vsyncpa %s1517, 1
    %1519 = vsyncpa [#allocation6], 1
    %s1520 = scalar_lea.sflag [#allocation6], 1
    %1521 = vsyncpa %s1520, 1
    %1522 = vsyncpa [#allocation11], 1
    %s1523 = scalar_lea.sflag [#allocation11], 1
    %1524 = vsyncpa %s1523, 1

</llo_original>
